<compile_context>
chip_gen: v6e
topology: v6e:2x2x1
jax: 0.10.0
libtpu: 0.0.40
codegen_flags: <defaults>
</compile_context>

<pallas_src>
import functools

import jax
import jax.numpy as jnp
import numpy as np
from jax.experimental import pallas as pl
from jax.experimental.pallas import tpu as pltpu

_LANE = 128     # vreg lane width  (last dim)
_SUBLANE = 8    # vreg sublanes    (second-to-last dim)


def _round_up(x, m):
    return ((x + m - 1) // m) * m


def _pick_row_tile(n_rows):
    # Big tiles amortize the ~0.35us/grid-step overhead; 512x128xf32 per buffer
    # (double-buffered) stays far under the scoped VMEM limit on v5e/v6e/v7x.
    return min(512, _round_up(n_rows, _SUBLANE))


# ----------------------------------------------------------------------------
# Kernel 1: fused linear (+ optional ReLU):  y = act(x @ Wt + b)
# ----------------------------------------------------------------------------
def _linear_kernel(x_ref, w_ref, b_ref, o_ref, *, apply_relu):
    acc = jnp.dot(x_ref[...], w_ref[...], preferred_element_type=jnp.float32)
    acc = acc + b_ref[...]                       # (1, Dout) broadcast over rows
    if apply_relu:
        acc = jnp.maximum(acc, 0.0)
    o_ref[...] = acc.astype(o_ref.dtype)


def linear_forward(x, w, b=None, *, apply_relu=False, compute_dtype=jnp.float32):
    """x: (B, Din); w: (Dout, Din) (PyTorch layout); b: (Dout,) or None."""
    B, Din = x.shape
    Dout = w.shape[0]

    # Lane-dense padding (Dout < 128 would force masked stores and waste MXU
    # columns) plus sublane-aligned batch tiling for HBM<->VMEM pipelining.
    din_p = _round_up(Din, _LANE)
    dout_p = _round_up(Dout, _LANE)
    tb = _pick_row_tile(B)
    rows_p = _round_up(B, tb)

    x_pad = jnp.zeros((rows_p, din_p), compute_dtype).at[:B, :Din].set(
        x.astype(compute_dtype))
    w_t = jnp.zeros((din_p, dout_p), compute_dtype).at[:Din, :Dout].set(
        jnp.transpose(w).astype(compute_dtype))
    bias = b if b is not None else jnp.zeros((Dout,), jnp.float32)
    bias_pad = jnp.zeros((1, dout_p), jnp.float32).at[0, :Dout].set(
        bias.astype(jnp.float32))

    itemsize = jnp.dtype(compute_dtype).itemsize
    cost = pl.CostEstimate(
        flops=2 * B * Din * Dout,
        transcendentals=0,
        bytes_accessed=(x_pad.size + w_t.size) * itemsize
        + (bias_pad.size + rows_p * dout_p) * 4,
    )

    out = pl.pallas_call(
        functools.partial(_linear_kernel, apply_relu=apply_relu),
        out_shape=jax.ShapeDtypeStruct((rows_p, dout_p), jnp.float32),
        grid_spec=pltpu.PrefetchScalarGridSpec(
            num_scalar_prefetch=0,
            grid=(rows_p // tb,),
            in_specs=[
                pl.BlockSpec((tb, din_p), lambda i: (i, 0)),       # batch-tiled
                pl.BlockSpec((din_p, dout_p), lambda i: (0, 0)),   # VMEM-resident
                pl.BlockSpec((1, dout_p), lambda i: (0, 0)),       # VMEM-resident
            ],
            out_specs=pl.BlockSpec((tb, dout_p), lambda i: (i, 0)),
        ),
        compiler_params=pltpu.CompilerParams(
            dimension_semantics=("parallel",),     # shard rows across TCs (v7x)
        ),
        cost_estimate=cost,
    )(x_pad, w_t, bias_pad)
    return out[:B, :Dout]


# ----------------------------------------------------------------------------
# Kernel 2: masked neighbor-softmax aggregation
#   out[v] = sum_u softmax_{u in N(v)}(s[u]) * h[u]   (zeros when N(v) empty)
# ----------------------------------------------------------------------------
def _attn_aggregate_kernel(mask_ref, s_ref, h_ref, o_ref):
    mask = mask_ref[...]                              # (TB, Np)  {0, 1}
    s = s_ref[...]                                    # (1, Np)   node scores
    neg = jnp.float32(-1e30)
    logits = jnp.where(mask > 0, s, neg)              # broadcast over rows
    m = jnp.max(logits, axis=-1, keepdims=True)       # per-row max over neighbors
    e = jnp.where(mask > 0, jnp.exp(s - m), 0.0)
    z = jnp.sum(e, axis=-1, keepdims=True)
    inv = jnp.where(z > 0.0, 1.0 / z, 0.0)            # no-neighbor rows -> zeros
    w = e * inv                                       # (TB, Np) attention weights
    o_ref[...] = jnp.dot(w, h_ref[...],
                         preferred_element_type=jnp.float32).astype(o_ref.dtype)


def attention_aggregate(adj_mask, scores, h):
    """adj_mask: (N, N) {0,1}; scores: (N,); h: (N, D) -> (N, D)."""
    N, D = h.shape
    n_lane = _round_up(N, _LANE)
    d_p = _round_up(D, _LANE)
    tb = _pick_row_tile(N)
    n_row = _round_up(N, tb)

    mask_pad = jnp.zeros((n_row, n_lane), jnp.float32).at[:N, :N].set(
        adj_mask.astype(jnp.float32))
    s_pad = jnp.full((1, n_lane), -1e30, jnp.float32).at[0, :N].set(
        scores.astype(jnp.float32))
    h_pad = jnp.zeros((n_lane, d_p), jnp.float32).at[:N, :D].set(
        h.astype(jnp.float32))

    cost = pl.CostEstimate(
        flops=2 * n_row * n_lane * d_p + 6 * n_row * n_lane,
        transcendentals=n_row * n_lane,
        bytes_accessed=(mask_pad.size + s_pad.size + h_pad.size + n_row * d_p) * 4,
    )

    # TODO(synk): for large sparse graphs the dense (N, N) mask and the fully
    # VMEM-resident h block should become a scalar-prefetched neighbor-list
    # gather with a tiled reduction over the node axis.
    out = pl.pallas_call(
        _attn_aggregate_kernel,
        out_shape=jax.ShapeDtypeStruct((n_row, d_p), jnp.float32),
        grid_spec=pltpu.PrefetchScalarGridSpec(
            num_scalar_prefetch=0,
            grid=(n_row // tb,),
            in_specs=[
                pl.BlockSpec((tb, n_lane), lambda i: (i, 0)),     # mask rows
                pl.BlockSpec((1, n_lane), lambda i: (0, 0)),      # scores (resident)
                pl.BlockSpec((n_lane, d_p), lambda i: (0, 0)),    # h (resident)
            ],
            out_specs=pl.BlockSpec((tb, d_p), lambda i: (i, 0)),
        ),
        compiler_params=pltpu.CompilerParams(
            dimension_semantics=("parallel",),
        ),
        cost_estimate=cost,
    )(mask_pad, s_pad, h_pad)
    return out[:N, :D]


# ----------------------------------------------------------------------------
# Module forward (NodeEmbeddingModule)
# ----------------------------------------------------------------------------
def attention_layer_forward(h, adj_mask, att_w, att_q):
    # score[u] = q(relu(W h[u])), computed densely once for all nodes.
    z = linear_forward(h, att_w, None, apply_relu=True)       # (N, hid_l)
    s = linear_forward(z, att_q, None, apply_relu=False)      # (N, 1)
    return attention_aggregate(adj_mask, s[:, 0], h)          # (N, in_l)


def node_embedding_forward(x_v, adj_mask, params):
    h = x_v
    for lw, lb, aw, aq in zip(params["layer_w"], params["layer_b"],
                              params["att_w"], params["att_q"]):
        h_n = attention_layer_forward(h, adj_mask, aw, aq)
        h = linear_forward(jnp.concatenate([h, h_n], axis=1), lw, lb,
                           apply_relu=True)
    out = linear_forward(h[14:15], params["out_w"], params["out_b"],
                         apply_relu=False)
    return out[0]


node_embedding_forward_jit = jax.jit(node_embedding_forward)


# ----------------------------------------------------------------------------
# Pure-JAX reference (mirrors the PyTorch per-node loops exactly)
# ----------------------------------------------------------------------------
def reference_forward(x_v, adj_np, params):
    h = x_v
    n = x_v.shape[0]
    for lw, lb, aw, aq in zip(params["layer_w"], params["layer_b"],
                              params["att_w"], params["att_q"]):
        rows = []
        for v in range(n):
            nbrs = np.nonzero(adj_np[v])[0]
            if nbrs.size == 0:
                rows.append(jnp.zeros((h.shape[1],), jnp.float32))
            else:
                ne = h[nbrs]                                      # (k, D)
                sc = jnp.maximum(ne @ aw.T, 0.0) @ aq.T           # (k, 1)
                wts = jax.nn.softmax(sc, axis=0)
                rows.append(jnp.sum(wts * ne, axis=0))
        h_n = jnp.stack(rows, axis=0)
        h = jnp.maximum(jnp.concatenate([h, h_n], axis=1) @ lw.T + lb, 0.0)
    return h[14] @ params["out_w"].T + params["out_b"]


if __name__ == "__main__":
    # Small shapes consistent with the module:  N=16 nodes (forward indexes
    # h_v[14]), input_dim=32, hidden_dim=16 (= input_dim/2 so layer shapes
    # chain, as in the module's docstring), num_layers=2, output_dim=8.
    n_nodes, input_dim, hidden_dim, output_dim, num_layers = 16, 32, 16, 8, 2

    key = jax.random.PRNGKey(0)
    keys = jax.random.split(key, 4 + 4 * num_layers)

    x_v = jax.random.normal(keys[0], (n_nodes, input_dim), dtype=jnp.float32)

    # Deterministic random graph as an adjacency mask; node 3 gets no neighbors
    # to exercise the zeros path of the module.
    adj = (jax.random.uniform(keys[1], (n_nodes, n_nodes)) < 0.35).astype(jnp.float32)
    adj = adj * (1.0 - jnp.eye(n_nodes, dtype=jnp.float32))      # no self-loops
    adj = adj.at[3, :].set(0.0)

    def linear_init(kw, kb, fan_out, fan_in, with_bias=True):
        bound = 1.0 / np.sqrt(fan_in)
        w = jax.random.uniform(kw, (fan_out, fan_in), minval=-bound,
                               maxval=bound, dtype=jnp.float32)
        b = (jax.random.uniform(kb, (fan_out,), minval=-bound, maxval=bound,
                                dtype=jnp.float32) if with_bias else None)
        return w, b

    params = {"layer_w": [], "layer_b": [], "att_w": [], "att_q": []}
    k_idx = 2
    for i in range(num_layers):
        in_i = input_dim // 2 ** i
        hid_i = hidden_dim // 2 ** i
        lw, lb = linear_init(keys[k_idx], keys[k_idx + 1], hid_i, 2 * in_i)
        aw, _ = linear_init(keys[k_idx + 2], keys[k_idx + 2], hid_i, in_i,
                            with_bias=False)
        aq, _ = linear_init(keys[k_idx + 3], keys[k_idx + 3], 1, hid_i,
                            with_bias=False)
        params["layer_w"].append(lw)
        params["layer_b"].append(lb)
        params["att_w"].append(aw)
        params["att_q"].append(aq)
        k_idx += 4
    ow, ob = linear_init(keys[k_idx], keys[k_idx + 1], output_dim,
                         hidden_dim // 2 ** (num_layers - 1))
    params["out_w"] = ow
    params["out_b"] = ob

    out = node_embedding_forward_jit(x_v, adj, params)
    out = jax.block_until_ready(out)

    ref = reference_forward(x_v, np.array(adj), params)

    assert out.shape == (output_dim,), out.shape
    assert jnp.allclose(out, ref, atol=1e-4, rtol=1e-4), (
        float(jnp.max(jnp.abs(out - ref))))

    print("KERNEL_OK")
</pallas_src>

<mosaic_0001>
module attributes {stable_mosaic.version = 11 : i64} {
  func.func @_linear_kernel(%arg0: i32, %arg1: memref<16x128xf32, #tpu.memory_space<vmem>>, %arg2: memref<128x128xf32, #tpu.memory_space<vmem>>, %arg3: memref<1x128xf32, #tpu.memory_space<vmem>>, %arg4: memref<16x128xf32, #tpu.memory_space<vmem>>) attributes {dimension_semantics = [#tpu.dimension_semantics<parallel>], iteration_bounds = array<i64: 1>, scalar_prefetch = 0 : i64, scratch_operands = 0 : i64, tpu.core_type = #tpu.core_type<tc>, window_params = [{transform_indices = @transform_0, window_bounds = array<i64: 16, 128>}, {pipeline_mode = #tpu.pipeline_mode<synchronous>, transform_indices = @transform_1, window_bounds = array<i64: 128, 128>}, {pipeline_mode = #tpu.pipeline_mode<synchronous>, transform_indices = @transform_2, window_bounds = array<i64: 1, 128>}, {transform_indices = @transform_3, window_bounds = array<i64: 16, 128>}]} {
    %c0 = arith.constant 0 : index
    %c0_0 = arith.constant 0 : index
    %0 = vector.load %arg1[%c0, %c0_0] : memref<16x128xf32, #tpu.memory_space<vmem>>, vector<16x128xf32>
    %c0_1 = arith.constant 0 : index
    %c0_2 = arith.constant 0 : index
    %1 = vector.load %arg2[%c0_1, %c0_2] : memref<128x128xf32, #tpu.memory_space<vmem>>, vector<128x128xf32>
    %cst = arith.constant dense<0.000000e+00> : vector<16x128xf32>
    %2 = tpu.matmul %0, %1, %cst {dimension_numbers = #tpu.dot_dimension_numbers<[1], [0], [0], [1], [0, 0, 1, 1], [], []>} : vector<16x128xf32>, vector<128x128xf32>, vector<16x128xf32> -> vector<16x128xf32>
    %c0_3 = arith.constant 0 : index
    %c0_4 = arith.constant 0 : index
    %3 = vector.load %arg3[%c0_3, %c0_4] : memref<1x128xf32, #tpu.memory_space<vmem>>, vector<1x128xf32>
    %4 = vector.broadcast %3 : vector<1x128xf32> to vector<16x128xf32>
    %5 = arith.addf %2, %4 : vector<16x128xf32>
    %cst_5 = arith.constant 0.000000e+00 : f32
    %6 = vector.broadcast %cst_5 : f32 to vector<16x128xf32>
    %7 = arith.maximumf %5, %6 : vector<16x128xf32>
    %c0_6 = arith.constant 0 : index
    %c0_7 = arith.constant 0 : index
    %8 = vector.load %arg4[%c0_6, %c0_7] : memref<16x128xf32, #tpu.memory_space<vmem>>, vector<16x128xf32>
    tpu.vector_store %arg4[%c0_6, %c0_7], %7 {strides = array<i32>} : memref<16x128xf32, #tpu.memory_space<vmem>>, vector<16x128xf32>,
    return
  }
  func.func @transform_0(%arg0: i32) -> (i32, i32) {
    %c0_i32 = arith.constant 0 : i32
    %c0_i32_0 = arith.constant 0 : i32
    return %arg0, %c0_i32 : i32, i32
  }
  func.func @transform_1(%arg0: i32) -> (i32, i32) {
    %c0_i32 = arith.constant 0 : i32
    %c0_i32_0 = arith.constant 0 : i32
    %c0_i32_1 = arith.constant 0 : i32
    return %c0_i32, %c0_i32_0 : i32, i32
  }
  func.func @transform_2(%arg0: i32) -> (i32, i32) {
    %c0_i32 = arith.constant 0 : i32
    %c0_i32_0 = arith.constant 0 : i32
    %c0_i32_1 = arith.constant 0 : i32
    return %c0_i32, %c0_i32_0 : i32, i32
  }
  func.func @transform_3(%arg0: i32) -> (i32, i32) {
    %c0_i32 = arith.constant 0 : i32
    %c0_i32_0 = arith.constant 0 : i32
    return %arg0, %c0_i32 : i32, i32
  }
}

module attributes {stable_mosaic.version = 11 : i64} {
  func.func @_linear_kernel(%arg0: i32, %arg1: memref<16x128xf32, #tpu.memory_space<vmem>>, %arg2: memref<128x128xf32, #tpu.memory_space<vmem>>, %arg3: memref<1x128xf32, #tpu.memory_space<vmem>>, %arg4: memref<16x128xf32, #tpu.memory_space<vmem>>) attributes {dimension_semantics = [#tpu.dimension_semantics<parallel>], iteration_bounds = array<i64: 1>, scalar_prefetch = 0 : i64, scratch_operands = 0 : i64, tpu.core_type = #tpu.core_type<tc>, window_params = [{transform_indices = @transform_0, window_bounds = array<i64: 16, 128>}, {pipeline_mode = #tpu.pipeline_mode<synchronous>, transform_indices = @transform_1, window_bounds = array<i64: 128, 128>}, {pipeline_mode = #tpu.pipeline_mode<synchronous>, transform_indices = @transform_2, window_bounds = array<i64: 1, 128>}, {transform_indices = @transform_3, window_bounds = array<i64: 16, 128>}]} {
    %c0 = arith.constant 0 : index
    %c0_0 = arith.constant 0 : index
    %0 = vector.load %arg1[%c0, %c0_0] : memref<16x128xf32, #tpu.memory_space<vmem>>, vector<16x128xf32>
    %c0_1 = arith.constant 0 : index
    %c0_2 = arith.constant 0 : index
    %1 = vector.load %arg2[%c0_1, %c0_2] : memref<128x128xf32, #tpu.memory_space<vmem>>, vector<128x128xf32>
    %cst = arith.constant dense<0.000000e+00> : vector<16x128xf32>
    %2 = tpu.matmul %0, %1, %cst {dimension_numbers = #tpu.dot_dimension_numbers<[1], [0], [0], [1], [0, 0, 1, 1], [], []>} : vector<16x128xf32>, vector<128x128xf32>, vector<16x128xf32> -> vector<16x128xf32>
    %c0_3 = arith.constant 0 : index
    %c0_4 = arith.constant 0 : index
    %3 = vector.load %arg3[%c0_3, %c0_4] : memref<1x128xf32, #tpu.memory_space<vmem>>, vector<1x128xf32>
    %4 = vector.broadcast %3 : vector<1x128xf32> to vector<16x128xf32>
    %5 = arith.addf %2, %4 : vector<16x128xf32>
    %c0_5 = arith.constant 0 : index
    %c0_6 = arith.constant 0 : index
    %6 = vector.load %arg4[%c0_5, %c0_6] : memref<16x128xf32, #tpu.memory_space<vmem>>, vector<16x128xf32>
    tpu.vector_store %arg4[%c0_5, %c0_6], %5 {strides = array<i32>} : memref<16x128xf32, #tpu.memory_space<vmem>>, vector<16x128xf32>,
    return
  }
  func.func @transform_0(%arg0: i32) -> (i32, i32) {
    %c0_i32 = arith.constant 0 : i32
    %c0_i32_0 = arith.constant 0 : i32
    return %arg0, %c0_i32 : i32, i32
  }
  func.func @transform_1(%arg0: i32) -> (i32, i32) {
    %c0_i32 = arith.constant 0 : i32
    %c0_i32_0 = arith.constant 0 : i32
    %c0_i32_1 = arith.constant 0 : i32
    return %c0_i32, %c0_i32_0 : i32, i32
  }
  func.func @transform_2(%arg0: i32) -> (i32, i32) {
    %c0_i32 = arith.constant 0 : i32
    %c0_i32_0 = arith.constant 0 : i32
    %c0_i32_1 = arith.constant 0 : i32
    return %c0_i32, %c0_i32_0 : i32, i32
  }
  func.func @transform_3(%arg0: i32) -> (i32, i32) {
    %c0_i32 = arith.constant 0 : i32
    %c0_i32_0 = arith.constant 0 : i32
    return %arg0, %c0_i32 : i32, i32
  }
}

module attributes {stable_mosaic.version = 11 : i64} {
  func.func @_attn_aggregate_kernel(%arg0: i32, %arg1: memref<16x128xf32, #tpu.memory_space<vmem>>, %arg2: memref<1x128xf32, #tpu.memory_space<vmem>>, %arg3: memref<128x128xf32, #tpu.memory_space<vmem>>, %arg4: memref<16x128xf32, #tpu.memory_space<vmem>>) attributes {dimension_semantics = [#tpu.dimension_semantics<parallel>], iteration_bounds = array<i64: 1>, scalar_prefetch = 0 : i64, scratch_operands = 0 : i64, tpu.core_type = #tpu.core_type<tc>, window_params = [{transform_indices = @transform_0, window_bounds = array<i64: 16, 128>}, {pipeline_mode = #tpu.pipeline_mode<synchronous>, transform_indices = @transform_1, window_bounds = array<i64: 1, 128>}, {pipeline_mode = #tpu.pipeline_mode<synchronous>, transform_indices = @transform_2, window_bounds = array<i64: 128, 128>}, {transform_indices = @transform_3, window_bounds = array<i64: 16, 128>}]} {
    %c0 = arith.constant 0 : index
    %c0_0 = arith.constant 0 : index
    %0 = vector.load %arg1[%c0, %c0_0] : memref<16x128xf32, #tpu.memory_space<vmem>>, vector<16x128xf32>
    %c0_1 = arith.constant 0 : index
    %c0_2 = arith.constant 0 : index
    %1 = vector.load %arg2[%c0_1, %c0_2] : memref<1x128xf32, #tpu.memory_space<vmem>>, vector<1x128xf32>
    %cst = arith.constant 0.000000e+00 : f32
    %2 = vector.broadcast %cst : f32 to vector<16x128xf32>
    %3 = arith.cmpf ogt, %0, %2 : vector<16x128xf32>
    %cst_3 = arith.constant -1.000000e+30 : f32
    %4 = vector.shape_cast %1 : vector<1x128xf32> to vector<1x128xf32>
    %5 = vector.broadcast %4 : vector<1x128xf32> to vector<16x128xf32>
    %6 = vector.broadcast %cst_3 : f32 to vector<16x128xf32>
    %7 = arith.select %3, %5, %6 : vector<16x128xi1>, vector<16x128xf32>
    %cst_4 = arith.constant dense<0xFF800000> : vector<16xf32>
    %8 = vector.multi_reduction <maximumf>, %7, %cst_4 [1] : vector<16x128xf32> to vector<16xf32>
    %9 = vector.shape_cast %8 : vector<16xf32> to vector<16x1xf32>
    %cst_5 = arith.constant 0.000000e+00 : f32
    %10 = vector.broadcast %cst_5 : f32 to vector<16x128xf32>
    %11 = arith.cmpf ogt, %0, %10 : vector<16x128xf32>
    %12 = vector.broadcast %1 : vector<1x128xf32> to vector<16x128xf32>
    %13 = vector.broadcast %9 : vector<16x1xf32> to vector<16x128xf32>
    %14 = arith.subf %12, %13 : vector<16x128xf32>
    %15 = math.exp %14 : vector<16x128xf32>
    %cst_6 = arith.constant 0.000000e+00 : f32
    %16 = vector.broadcast %cst_6 : f32 to vector<16x128xf32>
    %17 = arith.select %11, %15, %16 : vector<16x128xi1>, vector<16x128xf32>
    %cst_7 = arith.constant dense<0.000000e+00> : vector<16xf32>
    %18 = vector.multi_reduction <add>, %17, %cst_7 [1] : vector<16x128xf32> to vector<16xf32>
    %19 = vector.shape_cast %18 : vector<16xf32> to vector<16x1xf32>
    %cst_8 = arith.constant 0.000000e+00 : f32
    %20 = vector.broadcast %cst_8 : f32 to vector<16x1xf32>
    %21 = arith.cmpf ogt, %19, %20 : vector<16x1xf32>
    %cst_9 = arith.constant 1.000000e+00 : f32
    %22 = vector.broadcast %cst_9 : f32 to vector<16x1xf32>
    %23 = arith.divf %22, %19 : vector<16x1xf32>
    %cst_10 = arith.constant 0.000000e+00 : f32
    %24 = vector.broadcast %cst_10 : f32 to vector<16x1xf32>
    %25 = arith.select %21, %23, %24 : vector<16x1xi1>, vector<16x1xf32>
    %26 = vector.broadcast %25 : vector<16x1xf32> to vector<16x128xf32>
    %27 = arith.mulf %17, %26 : vector<16x128xf32>
    %c0_11 = arith.constant 0 : index
    %c0_12 = arith.constant 0 : index
    %28 = vector.load %arg3[%c0_11, %c0_12] : memref<128x128xf32, #tpu.memory_space<vmem>>, vector<128x128xf32>
    %cst_13 = arith.constant dense<0.000000e+00> : vector<16x128xf32>
    %29 = tpu.matmul %27, %28, %cst_13 {dimension_numbers = #tpu.dot_dimension_numbers<[1], [0], [0], [1], [0, 0, 1, 1], [], []>} : vector<16x128xf32>, vector<128x128xf32>, vector<16x128xf32> -> vector<16x128xf32>
    %c0_14 = arith.constant 0 : index
    %c0_15 = arith.constant 0 : index
    %30 = vector.load %arg4[%c0_14, %c0_15] : memref<16x128xf32, #tpu.memory_space<vmem>>, vector<16x128xf32>
    tpu.vector_store %arg4[%c0_14, %c0_15], %29 {strides = array<i32>} : memref<16x128xf32, #tpu.memory_space<vmem>>, vector<16x128xf32>,
    return
  }
  func.func @transform_0(%arg0: i32) -> (i32, i32) {
    %c0_i32 = arith.constant 0 : i32
    %c0_i32_0 = arith.constant 0 : i32
    return %arg0, %c0_i32 : i32, i32
  }
  func.func @transform_1(%arg0: i32) -> (i32, i32) {
    %c0_i32 = arith.constant 0 : i32
    %c0_i32_0 = arith.constant 0 : i32
    %c0_i32_1 = arith.constant 0 : i32
    return %c0_i32, %c0_i32_0 : i32, i32
  }
  func.func @transform_2(%arg0: i32) -> (i32, i32) {
    %c0_i32 = arith.constant 0 : i32
    %c0_i32_0 = arith.constant 0 : i32
    %c0_i32_1 = arith.constant 0 : i32
    return %c0_i32, %c0_i32_0 : i32, i32
  }
  func.func @transform_3(%arg0: i32) -> (i32, i32) {
    %c0_i32 = arith.constant 0 : i32
    %c0_i32_0 = arith.constant 0 : i32
    return %arg0, %c0_i32 : i32, i32
  }
}

module attributes {stable_mosaic.version = 11 : i64} {
  func.func @_linear_kernel(%arg0: i32, %arg1: memref<16x128xf32, #tpu.memory_space<vmem>>, %arg2: memref<128x128xf32, #tpu.memory_space<vmem>>, %arg3: memref<1x128xf32, #tpu.memory_space<vmem>>, %arg4: memref<16x128xf32, #tpu.memory_space<vmem>>) attributes {dimension_semantics = [#tpu.dimension_semantics<parallel>], iteration_bounds = array<i64: 1>, scalar_prefetch = 0 : i64, scratch_operands = 0 : i64, tpu.core_type = #tpu.core_type<tc>, window_params = [{transform_indices = @transform_0, window_bounds = array<i64: 16, 128>}, {pipeline_mode = #tpu.pipeline_mode<synchronous>, transform_indices = @transform_1, window_bounds = array<i64: 128, 128>}, {pipeline_mode = #tpu.pipeline_mode<synchronous>, transform_indices = @transform_2, window_bounds = array<i64: 1, 128>}, {transform_indices = @transform_3, window_bounds = array<i64: 16, 128>}]} {
    %c0 = arith.constant 0 : index
    %c0_0 = arith.constant 0 : index
    %0 = vector.load %arg1[%c0, %c0_0] : memref<16x128xf32, #tpu.memory_space<vmem>>, vector<16x128xf32>
    %c0_1 = arith.constant 0 : index
    %c0_2 = arith.constant 0 : index
    %1 = vector.load %arg2[%c0_1, %c0_2] : memref<128x128xf32, #tpu.memory_space<vmem>>, vector<128x128xf32>
    %cst = arith.constant dense<0.000000e+00> : vector<16x128xf32>
    %2 = tpu.matmul %0, %1, %cst {dimension_numbers = #tpu.dot_dimension_numbers<[1], [0], [0], [1], [0, 0, 1, 1], [], []>} : vector<16x128xf32>, vector<128x128xf32>, vector<16x128xf32> -> vector<16x128xf32>
    %c0_3 = arith.constant 0 : index
    %c0_4 = arith.constant 0 : index
    %3 = vector.load %arg3[%c0_3, %c0_4] : memref<1x128xf32, #tpu.memory_space<vmem>>, vector<1x128xf32>
    %4 = vector.broadcast %3 : vector<1x128xf32> to vector<16x128xf32>
    %5 = arith.addf %2, %4 : vector<16x128xf32>
    %cst_5 = arith.constant 0.000000e+00 : f32
    %6 = vector.broadcast %cst_5 : f32 to vector<16x128xf32>
    %7 = arith.maximumf %5, %6 : vector<16x128xf32>
    %c0_6 = arith.constant 0 : index
    %c0_7 = arith.constant 0 : index
    %8 = vector.load %arg4[%c0_6, %c0_7] : memref<16x128xf32, #tpu.memory_space<vmem>>, vector<16x128xf32>
    tpu.vector_store %arg4[%c0_6, %c0_7], %7 {strides = array<i32>} : memref<16x128xf32, #tpu.memory_space<vmem>>, vector<16x128xf32>,
    return
  }
  func.func @transform_0(%arg0: i32) -> (i32, i32) {
    %c0_i32 = arith.constant 0 : i32
    %c0_i32_0 = arith.constant 0 : i32
    return %arg0, %c0_i32 : i32, i32
  }
  func.func @transform_1(%arg0: i32) -> (i32, i32) {
    %c0_i32 = arith.constant 0 : i32
    %c0_i32_0 = arith.constant 0 : i32
    %c0_i32_1 = arith.constant 0 : i32
    return %c0_i32, %c0_i32_0 : i32, i32
  }
  func.func @transform_2(%arg0: i32) -> (i32, i32) {
    %c0_i32 = arith.constant 0 : i32
    %c0_i32_0 = arith.constant 0 : i32
    %c0_i32_1 = arith.constant 0 : i32
    return %c0_i32, %c0_i32_0 : i32, i32
  }
  func.func @transform_3(%arg0: i32) -> (i32, i32) {
    %c0_i32 = arith.constant 0 : i32
    %c0_i32_0 = arith.constant 0 : i32
    return %arg0, %c0_i32 : i32, i32
  }
}

module attributes {stable_mosaic.version = 11 : i64} {
  func.func @_linear_kernel(%arg0: i32, %arg1: memref<16x128xf32, #tpu.memory_space<vmem>>, %arg2: memref<128x128xf32, #tpu.memory_space<vmem>>, %arg3: memref<1x128xf32, #tpu.memory_space<vmem>>, %arg4: memref<16x128xf32, #tpu.memory_space<vmem>>) attributes {dimension_semantics = [#tpu.dimension_semantics<parallel>], iteration_bounds = array<i64: 1>, scalar_prefetch = 0 : i64, scratch_operands = 0 : i64, tpu.core_type = #tpu.core_type<tc>, window_params = [{transform_indices = @transform_0, window_bounds = array<i64: 16, 128>}, {pipeline_mode = #tpu.pipeline_mode<synchronous>, transform_indices = @transform_1, window_bounds = array<i64: 128, 128>}, {pipeline_mode = #tpu.pipeline_mode<synchronous>, transform_indices = @transform_2, window_bounds = array<i64: 1, 128>}, {transform_indices = @transform_3, window_bounds = array<i64: 16, 128>}]} {
    %c0 = arith.constant 0 : index
    %c0_0 = arith.constant 0 : index
    %0 = vector.load %arg1[%c0, %c0_0] : memref<16x128xf32, #tpu.memory_space<vmem>>, vector<16x128xf32>
    %c0_1 = arith.constant 0 : index
    %c0_2 = arith.constant 0 : index
    %1 = vector.load %arg2[%c0_1, %c0_2] : memref<128x128xf32, #tpu.memory_space<vmem>>, vector<128x128xf32>
    %cst = arith.constant dense<0.000000e+00> : vector<16x128xf32>
    %2 = tpu.matmul %0, %1, %cst {dimension_numbers = #tpu.dot_dimension_numbers<[1], [0], [0], [1], [0, 0, 1, 1], [], []>} : vector<16x128xf32>, vector<128x128xf32>, vector<16x128xf32> -> vector<16x128xf32>
    %c0_3 = arith.constant 0 : index
    %c0_4 = arith.constant 0 : index
    %3 = vector.load %arg3[%c0_3, %c0_4] : memref<1x128xf32, #tpu.memory_space<vmem>>, vector<1x128xf32>
    %4 = vector.broadcast %3 : vector<1x128xf32> to vector<16x128xf32>
    %5 = arith.addf %2, %4 : vector<16x128xf32>
    %cst_5 = arith.constant 0.000000e+00 : f32
    %6 = vector.broadcast %cst_5 : f32 to vector<16x128xf32>
    %7 = arith.maximumf %5, %6 : vector<16x128xf32>
    %c0_6 = arith.constant 0 : index
    %c0_7 = arith.constant 0 : index
    %8 = vector.load %arg4[%c0_6, %c0_7] : memref<16x128xf32, #tpu.memory_space<vmem>>, vector<16x128xf32>
    tpu.vector_store %arg4[%c0_6, %c0_7], %7 {strides = array<i32>} : memref<16x128xf32, #tpu.memory_space<vmem>>, vector<16x128xf32>,
    return
  }
  func.func @transform_0(%arg0: i32) -> (i32, i32) {
    %c0_i32 = arith.constant 0 : i32
    %c0_i32_0 = arith.constant 0 : i32
    return %arg0, %c0_i32 : i32, i32
  }
  func.func @transform_1(%arg0: i32) -> (i32, i32) {
    %c0_i32 = arith.constant 0 : i32
    %c0_i32_0 = arith.constant 0 : i32
    %c0_i32_1 = arith.constant 0 : i32
    return %c0_i32, %c0_i32_0 : i32, i32
  }
  func.func @transform_2(%arg0: i32) -> (i32, i32) {
    %c0_i32 = arith.constant 0 : i32
    %c0_i32_0 = arith.constant 0 : i32
    %c0_i32_1 = arith.constant 0 : i32
    return %c0_i32, %c0_i32_0 : i32, i32
  }
  func.func @transform_3(%arg0: i32) -> (i32, i32) {
    %c0_i32 = arith.constant 0 : i32
    %c0_i32_0 = arith.constant 0 : i32
    return %arg0, %c0_i32 : i32, i32
  }
}

module attributes {stable_mosaic.version = 11 : i64} {
  func.func @_linear_kernel(%arg0: i32, %arg1: memref<16x128xf32, #tpu.memory_space<vmem>>, %arg2: memref<128x128xf32, #tpu.memory_space<vmem>>, %arg3: memref<1x128xf32, #tpu.memory_space<vmem>>, %arg4: memref<16x128xf32, #tpu.memory_space<vmem>>) attributes {dimension_semantics = [#tpu.dimension_semantics<parallel>], iteration_bounds = array<i64: 1>, scalar_prefetch = 0 : i64, scratch_operands = 0 : i64, tpu.core_type = #tpu.core_type<tc>, window_params = [{transform_indices = @transform_0, window_bounds = array<i64: 16, 128>}, {pipeline_mode = #tpu.pipeline_mode<synchronous>, transform_indices = @transform_1, window_bounds = array<i64: 128, 128>}, {pipeline_mode = #tpu.pipeline_mode<synchronous>, transform_indices = @transform_2, window_bounds = array<i64: 1, 128>}, {transform_indices = @transform_3, window_bounds = array<i64: 16, 128>}]} {
    %c0 = arith.constant 0 : index
    %c0_0 = arith.constant 0 : index
    %0 = vector.load %arg1[%c0, %c0_0] : memref<16x128xf32, #tpu.memory_space<vmem>>, vector<16x128xf32>
    %c0_1 = arith.constant 0 : index
    %c0_2 = arith.constant 0 : index
    %1 = vector.load %arg2[%c0_1, %c0_2] : memref<128x128xf32, #tpu.memory_space<vmem>>, vector<128x128xf32>
    %cst = arith.constant dense<0.000000e+00> : vector<16x128xf32>
    %2 = tpu.matmul %0, %1, %cst {dimension_numbers = #tpu.dot_dimension_numbers<[1], [0], [0], [1], [0, 0, 1, 1], [], []>} : vector<16x128xf32>, vector<128x128xf32>, vector<16x128xf32> -> vector<16x128xf32>
    %c0_3 = arith.constant 0 : index
    %c0_4 = arith.constant 0 : index
    %3 = vector.load %arg3[%c0_3, %c0_4] : memref<1x128xf32, #tpu.memory_space<vmem>>, vector<1x128xf32>
    %4 = vector.broadcast %3 : vector<1x128xf32> to vector<16x128xf32>
    %5 = arith.addf %2, %4 : vector<16x128xf32>
    %cst_5 = arith.constant 0.000000e+00 : f32
    %6 = vector.broadcast %cst_5 : f32 to vector<16x128xf32>
    %7 = arith.maximumf %5, %6 : vector<16x128xf32>
    %c0_6 = arith.constant 0 : index
    %c0_7 = arith.constant 0 : index
    %8 = vector.load %arg4[%c0_6, %c0_7] : memref<16x128xf32, #tpu.memory_space<vmem>>, vector<16x128xf32>
    tpu.vector_store %arg4[%c0_6, %c0_7], %7 {strides = array<i32>} : memref<16x128xf32, #tpu.memory_space<vmem>>, vector<16x128xf32>,
    return
  }
  func.func @transform_0(%arg0: i32) -> (i32, i32) {
    %c0_i32 = arith.constant 0 : i32
    %c0_i32_0 = arith.constant 0 : i32
    return %arg0, %c0_i32 : i32, i32
  }
  func.func @transform_1(%arg0: i32) -> (i32, i32) {
    %c0_i32 = arith.constant 0 : i32
    %c0_i32_0 = arith.constant 0 : i32
    %c0_i32_1 = arith.constant 0 : i32
    return %c0_i32, %c0_i32_0 : i32, i32
  }
  func.func @transform_2(%arg0: i32) -> (i32, i32) {
    %c0_i32 = arith.constant 0 : i32
    %c0_i32_0 = arith.constant 0 : i32
    %c0_i32_1 = arith.constant 0 : i32
    return %c0_i32, %c0_i32_0 : i32, i32
  }
  func.func @transform_3(%arg0: i32) -> (i32, i32) {
    %c0_i32 = arith.constant 0 : i32
    %c0_i32_0 = arith.constant 0 : i32
    return %arg0, %c0_i32 : i32, i32
  }
}

module attributes {stable_mosaic.version = 11 : i64} {
  func.func @_linear_kernel(%arg0: i32, %arg1: memref<16x128xf32, #tpu.memory_space<vmem>>, %arg2: memref<128x128xf32, #tpu.memory_space<vmem>>, %arg3: memref<1x128xf32, #tpu.memory_space<vmem>>, %arg4: memref<16x128xf32, #tpu.memory_space<vmem>>) attributes {dimension_semantics = [#tpu.dimension_semantics<parallel>], iteration_bounds = array<i64: 1>, scalar_prefetch = 0 : i64, scratch_operands = 0 : i64, tpu.core_type = #tpu.core_type<tc>, window_params = [{transform_indices = @transform_0, window_bounds = array<i64: 16, 128>}, {pipeline_mode = #tpu.pipeline_mode<synchronous>, transform_indices = @transform_1, window_bounds = array<i64: 128, 128>}, {pipeline_mode = #tpu.pipeline_mode<synchronous>, transform_indices = @transform_2, window_bounds = array<i64: 1, 128>}, {transform_indices = @transform_3, window_bounds = array<i64: 16, 128>}]} {
    %c0 = arith.constant 0 : index
    %c0_0 = arith.constant 0 : index
    %0 = vector.load %arg1[%c0, %c0_0] : memref<16x128xf32, #tpu.memory_space<vmem>>, vector<16x128xf32>
    %c0_1 = arith.constant 0 : index
    %c0_2 = arith.constant 0 : index
    %1 = vector.load %arg2[%c0_1, %c0_2] : memref<128x128xf32, #tpu.memory_space<vmem>>, vector<128x128xf32>
    %cst = arith.constant dense<0.000000e+00> : vector<16x128xf32>
    %2 = tpu.matmul %0, %1, %cst {dimension_numbers = #tpu.dot_dimension_numbers<[1], [0], [0], [1], [0, 0, 1, 1], [], []>} : vector<16x128xf32>, vector<128x128xf32>, vector<16x128xf32> -> vector<16x128xf32>
    %c0_3 = arith.constant 0 : index
    %c0_4 = arith.constant 0 : index
    %3 = vector.load %arg3[%c0_3, %c0_4] : memref<1x128xf32, #tpu.memory_space<vmem>>, vector<1x128xf32>
    %4 = vector.broadcast %3 : vector<1x128xf32> to vector<16x128xf32>
    %5 = arith.addf %2, %4 : vector<16x128xf32>
    %c0_5 = arith.constant 0 : index
    %c0_6 = arith.constant 0 : index
    %6 = vector.load %arg4[%c0_5, %c0_6] : memref<16x128xf32, #tpu.memory_space<vmem>>, vector<16x128xf32>
    tpu.vector_store %arg4[%c0_5, %c0_6], %5 {strides = array<i32>} : memref<16x128xf32, #tpu.memory_space<vmem>>, vector<16x128xf32>,
    return
  }
  func.func @transform_0(%arg0: i32) -> (i32, i32) {
    %c0_i32 = arith.constant 0 : i32
    %c0_i32_0 = arith.constant 0 : i32
    return %arg0, %c0_i32 : i32, i32
  }
  func.func @transform_1(%arg0: i32) -> (i32, i32) {
    %c0_i32 = arith.constant 0 : i32
    %c0_i32_0 = arith.constant 0 : i32
    %c0_i32_1 = arith.constant 0 : i32
    return %c0_i32, %c0_i32_0 : i32, i32
  }
  func.func @transform_2(%arg0: i32) -> (i32, i32) {
    %c0_i32 = arith.constant 0 : i32
    %c0_i32_0 = arith.constant 0 : i32
    %c0_i32_1 = arith.constant 0 : i32
    return %c0_i32, %c0_i32_0 : i32, i32
  }
  func.func @transform_3(%arg0: i32) -> (i32, i32) {
    %c0_i32 = arith.constant 0 : i32
    %c0_i32_0 = arith.constant 0 : i32
    return %arg0, %c0_i32 : i32, i32
  }
}

module attributes {stable_mosaic.version = 11 : i64} {
  func.func @_linear_kernel(%arg0: i32, %arg1: memref<8x128xf32, #tpu.memory_space<vmem>>, %arg2: memref<128x128xf32, #tpu.memory_space<vmem>>, %arg3: memref<1x128xf32, #tpu.memory_space<vmem>>, %arg4: memref<8x128xf32, #tpu.memory_space<vmem>>) attributes {dimension_semantics = [#tpu.dimension_semantics<parallel>], iteration_bounds = array<i64: 1>, scalar_prefetch = 0 : i64, scratch_operands = 0 : i64, tpu.core_type = #tpu.core_type<tc>, window_params = [{transform_indices = @transform_0, window_bounds = array<i64: 8, 128>}, {pipeline_mode = #tpu.pipeline_mode<synchronous>, transform_indices = @transform_1, window_bounds = array<i64: 128, 128>}, {pipeline_mode = #tpu.pipeline_mode<synchronous>, transform_indices = @transform_2, window_bounds = array<i64: 1, 128>}, {transform_indices = @transform_3, window_bounds = array<i64: 8, 128>}]} {
    %c0 = arith.constant 0 : index
    %c0_0 = arith.constant 0 : index
    %0 = vector.load %arg1[%c0, %c0_0] : memref<8x128xf32, #tpu.memory_space<vmem>>, vector<8x128xf32>
    %c0_1 = arith.constant 0 : index
    %c0_2 = arith.constant 0 : index
    %1 = vector.load %arg2[%c0_1, %c0_2] : memref<128x128xf32, #tpu.memory_space<vmem>>, vector<128x128xf32>
    %cst = arith.constant dense<0.000000e+00> : vector<8x128xf32>
    %2 = tpu.matmul %0, %1, %cst {dimension_numbers = #tpu.dot_dimension_numbers<[1], [0], [0], [1], [0, 0, 1, 1], [], []>} : vector<8x128xf32>, vector<128x128xf32>, vector<8x128xf32> -> vector<8x128xf32>
    %c0_3 = arith.constant 0 : index
    %c0_4 = arith.constant 0 : index
    %3 = vector.load %arg3[%c0_3, %c0_4] : memref<1x128xf32, #tpu.memory_space<vmem>>, vector<1x128xf32>
    %4 = vector.broadcast %3 : vector<1x128xf32> to vector<8x128xf32>
    %5 = arith.addf %2, %4 : vector<8x128xf32>
    %c0_5 = arith.constant 0 : index
    %c0_6 = arith.constant 0 : index
    %6 = vector.load %arg4[%c0_5, %c0_6] : memref<8x128xf32, #tpu.memory_space<vmem>>, vector<8x128xf32>
    tpu.vector_store %arg4[%c0_5, %c0_6], %5 {strides = array<i32>} : memref<8x128xf32, #tpu.memory_space<vmem>>, vector<8x128xf32>,
    return
  }
  func.func @transform_0(%arg0: i32) -> (i32, i32) {
    %c0_i32 = arith.constant 0 : i32
    %c0_i32_0 = arith.constant 0 : i32
    return %arg0, %c0_i32 : i32, i32
  }
  func.func @transform_1(%arg0: i32) -> (i32, i32) {
    %c0_i32 = arith.constant 0 : i32
    %c0_i32_0 = arith.constant 0 : i32
    %c0_i32_1 = arith.constant 0 : i32
    return %c0_i32, %c0_i32_0 : i32, i32
  }
  func.func @transform_2(%arg0: i32) -> (i32, i32) {
    %c0_i32 = arith.constant 0 : i32
    %c0_i32_0 = arith.constant 0 : i32
    %c0_i32_1 = arith.constant 0 : i32
    return %c0_i32, %c0_i32_0 : i32, i32
  }
  func.func @transform_3(%arg0: i32) -> (i32, i32) {
    %c0_i32 = arith.constant 0 : i32
    %c0_i32_0 = arith.constant 0 : i32
    return %arg0, %c0_i32 : i32, i32
  }
}

</mosaic_0001>

<llo_original>
// kernel: node_embedding_forward.10
$region0: #{node_embedding_forward.10}
  #allocation0 [shape = 'u32[]', space=smem, size = 0x4, offset = 0x4, fixed_abs, tag = 'smem constant byte address 0x4 - core index']
  #allocation1 [shape = 'u32[144,128]{1,0:T(1,128)}', space=vmem, size = 0x12000, scoped, tag = 'internal scratch']
  %s0 = inlined_call_operand.vmem [shape: f32[16,128], index: 0, kind: input, shape index: {}]
  %s1 = inlined_call_operand.vmem [shape: f32[128,128], index: 1, kind: input, shape index: {}]
  %s2 = inlined_call_operand.vmem [shape: f32[1,128], index: 2, kind: input, shape index: {}]
  %s3 = inlined_call_operand.vmem [shape: f32[16,128], index: 3, kind: output, shape index: {}]
  %s4 = sld [smem:[#allocation0]]
  $region22: #{node_embedding_forward.10} parent=0
    _
  %s6 = ssub.s32 1, %s4
  %s7 = scalar_select 0, %s6, %s4
  // Predicated region
  $region2: #{node_embedding_forward.10} parent=0 // pred_check
    _
  $region3: #{node_embedding_forward.10} parent=0 // pred_check_branch
    %9 = sbr.rel (0) target = $region5
  $region4: #{node_embedding_forward.10} parent=0 // pred_region
    _
  $region5: #{node_embedding_forward.10} parent=0 // pred_fallthru
    _
  // Predicated region
  $region6: #{node_embedding_forward.10} parent=0 // pred_check
    _
  $region7: #{node_embedding_forward.10} parent=0 // pred_check_branch
    %11 = sbr.rel (0) target = $region9
  $region8: #{node_embedding_forward.10} parent=0 // pred_region
    _
  $region9: #{node_embedding_forward.10} parent=0 // pred_fallthru
    _
  // Predicated region
  $region10: #{node_embedding_forward.10} parent=0 // pred_check
    _
  $region11: #{node_embedding_forward.10} parent=0 // pred_check_branch
    %13 = sbr.rel (0) target = $region13
  $region12: #{node_embedding_forward.10} parent=0 // pred_region
    _
  $region13: #{node_embedding_forward.10} parent=0 // pred_fallthru
    _
  %v14 = vld [vmem:[%s0] sm:$0xff]
  %v15 = vld [vmem:[%s0 + $0x8] sm:$0xff]
  %v16 = vld [vmem:[%s1] sm:$0xff]
  %v17 = vld [vmem:[%s1 + $0x8] sm:$0xff]
  %v18 = vld [vmem:[%s1 + $0x10] sm:$0xff]
  %v19 = vld [vmem:[%s1 + $0x18] sm:$0xff]
  %v20 = vld [vmem:[%s1 + $0x20] sm:$0xff]
  %v21 = vld [vmem:[%s1 + $0x28] sm:$0xff]
  %v22 = vld [vmem:[%s1 + $0x30] sm:$0xff]
  %v23 = vld [vmem:[%s1 + $0x38] sm:$0xff]
  %v24 = vld [vmem:[%s1 + $0x40] sm:$0xff]
  %v25 = vld [vmem:[%s1 + $0x48] sm:$0xff]
  %v26 = vld [vmem:[%s1 + $0x50] sm:$0xff]
  %v27 = vld [vmem:[%s1 + $0x58] sm:$0xff]
  %v28 = vld [vmem:[%s1 + $0x60] sm:$0xff]
  %v29 = vld [vmem:[%s1 + $0x68] sm:$0xff]
  %v30 = vld [vmem:[%s1 + $0x70] sm:$0xff]
  %v31 = vld [vmem:[%s1 + $0x78] sm:$0xff]
  %v32 = vld [vmem:[%s2] sm:$0x1]
  %v34 = vlaneseq
  %v35 = vshrl.u32 %v34, 7
  %v36 = vsub.s32 0, %v35
  %v37 = vrot.slane %v32, %v36
  %39 = vmatprep.subr.mxu0 0.0
  %40 = vmatpush1.msra.mxu0 %v31
  %41 = vmatprep.subr.mxu0 0.0
  %42 = vmatpush1.msra.mxu0 %v30
  %43 = vmatprep.subr.mxu0 0.0
  %44 = vmatpush1.msra.mxu0 %v29
  %45 = vmatprep.subr.mxu0 0.0
  %46 = vmatpush1.msra.mxu0 %v28
  %47 = vmatprep.subr.mxu0 0.0
  %48 = vmatpush1.msra.mxu0 %v27
  %49 = vmatprep.subr.mxu0 0.0
  %50 = vmatpush1.msra.mxu0 %v26
  %51 = vmatprep.subr.mxu0 0.0
  %52 = vmatpush1.msra.mxu0 %v25
  %53 = vmatprep.subr.mxu0 0.0
  %54 = vmatpush1.msra.mxu0 %v24
  %55 = vmatprep.subr.mxu0 0.0
  %56 = vmatpush1.msra.mxu0 %v23
  %57 = vmatprep.subr.mxu0 0.0
  %58 = vmatpush1.msra.mxu0 %v22
  %59 = vmatprep.subr.mxu0 0.0
  %60 = vmatpush1.msra.mxu0 %v21
  %61 = vmatprep.subr.mxu0 0.0
  %62 = vmatpush1.msra.mxu0 %v20
  %63 = vmatprep.subr.mxu0 0.0
  %64 = vmatpush1.msra.mxu0 %v19
  %65 = vmatprep.subr.mxu0 0.0
  %66 = vmatpush1.msra.mxu0 %v18
  %67 = vmatprep.subr.mxu0 0.0
  %68 = vmatpush1.msra.mxu0 %v17
  %69 = vmatprep.subr.mxu0 0.0
  %70 = vmatpush1.msra.mxu0 %v16
  %71 = vmatprep.subr.mxu0 0.0
  %72 = vmatpush2.msra.mxu0 0.0
  %73 = vmatprep.subr.mxu0 0.0
  %74 = vmatpush2.msra.mxu0 0.0
  %75 = vmatprep.subr.mxu0 0.0
  %76 = vmatpush2.msra.mxu0 0.0
  %77 = vmatprep.subr.mxu0 0.0
  %78 = vmatpush2.msra.mxu0 0.0
  %79 = vmatprep.subr.mxu0 0.0
  %80 = vmatpush2.msra.mxu0 0.0
  %81 = vmatprep.subr.mxu0 0.0
  %82 = vmatpush2.msra.mxu0 0.0
  %83 = vmatprep.subr.mxu0 0.0
  %84 = vmatpush2.msra.mxu0 0.0
  %85 = vmatprep.subr.mxu0 0.0
  %86 = vmatpush2.msra.mxu0 0.0
  %87 = vmatprep.subr.mxu0 0.0
  %88 = vmatpush2.msra.mxu0 0.0
  %89 = vmatprep.subr.mxu0 0.0
  %90 = vmatpush2.msra.mxu0 0.0
  %91 = vmatprep.subr.mxu0 0.0
  %92 = vmatpush2.msra.mxu0 0.0
  %93 = vmatprep.subr.mxu0 0.0
  %94 = vmatpush2.msra.mxu0 0.0
  %95 = vmatprep.subr.mxu0 0.0
  %96 = vmatpush2.msra.mxu0 0.0
  %97 = vmatprep.subr.mxu0 0.0
  %98 = vmatpush2.msra.mxu0 0.0
  %99 = vmatprep.subr.mxu0 0.0
  %100 = vmatpush2.msra.mxu0 0.0
  %101 = vmatprep.subr.mxu0 0.0
  %102 = vmatpush2.msra.mxu0 0.0
  %103 = vmatprep.mubr.f32.mxu0 0.0
  %104 = vmatmul.mubr.f32.gmra.mxu0 %v14
  %v105 = vpop.f32.mrf.mxu0
  %v106 = vadd.f32 %v37, %v105
  %v107 = vpop.f32.mrf.mxu0
  %108 = vmatprep.mubr.f32.mxu0 0.0
  %109 = vmatmul.mubr.f32.gmra.mxu0 %v15
  %v110 = vpop.f32.mrf.mxu0
  %v111 = vadd.f32 %v37, %v110
  %v112 = vpop.f32.mrf.mxu0
  %113 = vdwg.mxu0
  %114 = vst [vmem:[%s3] sm:$0xff] %v106
  %115 = vst [vmem:[%s3 + $0x8] sm:$0xff] %v111
  // Predicated region
  $region14: #{node_embedding_forward.10} parent=0 // pred_check
    _
  $region15: #{node_embedding_forward.10} parent=0 // pred_check_branch
    %117 = sbr.rel (0) target = $region17
  $region16: #{node_embedding_forward.10} parent=0 // pred_region
    _
  $region17: #{node_embedding_forward.10} parent=0 // pred_fallthru
    _
  // Predicated region
  $region18: #{node_embedding_forward.10} parent=0 // pred_check
    _
  $region19: #{node_embedding_forward.10} parent=0 // pred_check_branch
    %119 = sbr.rel (0) target = $region21
  $region20: #{node_embedding_forward.10} parent=0 // pred_region
    _
  $region21: #{node_embedding_forward.10} parent=0 // pred_fallthru
    _

// kernel: node_embedding_forward.11
$region0: #{node_embedding_forward.11}
  #allocation0 [shape = 'u32[]', space=smem, size = 0x4, offset = 0x4, fixed_abs, tag = 'smem constant byte address 0x4 - core index']
  #allocation1 [shape = 'u32[144,128]{1,0:T(1,128)}', space=vmem, size = 0x12000, scoped, tag = 'internal scratch']
  %s0 = inlined_call_operand.vmem [shape: f32[16,128], index: 0, kind: input, shape index: {}]
  %s1 = inlined_call_operand.vmem [shape: f32[1,128], index: 1, kind: input, shape index: {}]
  %s2 = inlined_call_operand.vmem [shape: f32[128,128], index: 2, kind: input, shape index: {}]
  %s3 = inlined_call_operand.vmem [shape: f32[16,128], index: 3, kind: output, shape index: {}]
  %s4 = sld [smem:[#allocation0]]
  $region22: #{node_embedding_forward.11} parent=0
    _
  %s6 = ssub.s32 1, %s4
  %s7 = scalar_select 0, %s6, %s4
  // Predicated region
  $region2: #{node_embedding_forward.11} parent=0 // pred_check
    _
  $region3: #{node_embedding_forward.11} parent=0 // pred_check_branch
    %9 = sbr.rel (0) target = $region5
  $region4: #{node_embedding_forward.11} parent=0 // pred_region
    _
  $region5: #{node_embedding_forward.11} parent=0 // pred_fallthru
    _
  // Predicated region
  $region6: #{node_embedding_forward.11} parent=0 // pred_check
    _
  $region7: #{node_embedding_forward.11} parent=0 // pred_check_branch
    %11 = sbr.rel (0) target = $region9
  $region8: #{node_embedding_forward.11} parent=0 // pred_region
    _
  $region9: #{node_embedding_forward.11} parent=0 // pred_fallthru
    _
  // Predicated region
  $region10: #{node_embedding_forward.11} parent=0 // pred_check
    _
  $region11: #{node_embedding_forward.11} parent=0 // pred_check_branch
    %13 = sbr.rel (0) target = $region13
  $region12: #{node_embedding_forward.11} parent=0 // pred_region
    _
  $region13: #{node_embedding_forward.11} parent=0 // pred_fallthru
    _
  %v14 = vld [vmem:[%s0] sm:$0xff]
  %v15 = vld [vmem:[%s0 + $0x8] sm:$0xff]
  %v16 = vld [vmem:[%s1] sm:$0x1]
  %vm17 = vcmp.gt.f32.partialorder %v14, 0.0
  %vm18 = vcmp.gt.f32.partialorder %v15, 0.0
  %v20 = vlaneseq
  %v21 = vshrl.u32 %v20, 7
  %v22 = vsub.s32 0, %v21
  %v23 = vrot.slane %v16, %v22
  %v25 = vsel %vm17, %v23, -1e+30
  %v26 = vsel %vm18, %v23, -1e+30
  %27 = vmax.xlane.f32.xlu0 %v25
  %v28 = vpop.xlane.xlu0 %27
  %29 = vmax.xlane.f32.xlu0 %v26
  %v30 = vpop.xlane.xlu0 %29
  %v31 = vsub.f32 %v23, %v28
  %v32 = vsub.f32 %v23, %v30
  %v33 = vmul.f32 %v31, 1.442695
  %v34 = vpow.pop %v33
  %v35 = vmul.f32 %v32, 1.442695
  %v36 = vpow.pop %v35
  %v37 = vsel %vm17, %v34, 0.0
  %v38 = vsel %vm18, %v36, 0.0
  %39 = vadd.xlane.f32.xlu0 %v37
  %v40 = vpop.xlane.xlu0 %39
  %41 = vadd.xlane.f32.xlu0 %v38
  %v42 = vpop.xlane.xlu0 %41
  %vm43 = vcmp.gt.f32.partialorder %v40, 0.0
  %vm44 = vcmp.gt.f32.partialorder %v42, 0.0
  %v45 = vrcp.pop %v40
  %v46 = vmul.f32 1.0, %v45
  %v47 = vrcp.pop %v42
  %v48 = vmul.f32 1.0, %v47
  %v49 = vsel %vm43, %v46, 0.0
  %v50 = vsel %vm44, %v48, 0.0
  %v51 = vmul.f32 %v37, %v49
  %v52 = vmul.f32 %v38, %v50
  %v53 = vld [vmem:[%s2] sm:$0xff]
  %v54 = vld [vmem:[%s2 + $0x8] sm:$0xff]
  %v55 = vld [vmem:[%s2 + $0x10] sm:$0xff]
  %v56 = vld [vmem:[%s2 + $0x18] sm:$0xff]
  %v57 = vld [vmem:[%s2 + $0x20] sm:$0xff]
  %v58 = vld [vmem:[%s2 + $0x28] sm:$0xff]
  %v59 = vld [vmem:[%s2 + $0x30] sm:$0xff]
  %v60 = vld [vmem:[%s2 + $0x38] sm:$0xff]
  %v61 = vld [vmem:[%s2 + $0x40] sm:$0xff]
  %v62 = vld [vmem:[%s2 + $0x48] sm:$0xff]
  %v63 = vld [vmem:[%s2 + $0x50] sm:$0xff]
  %v64 = vld [vmem:[%s2 + $0x58] sm:$0xff]
  %v65 = vld [vmem:[%s2 + $0x60] sm:$0xff]
  %v66 = vld [vmem:[%s2 + $0x68] sm:$0xff]
  %v67 = vld [vmem:[%s2 + $0x70] sm:$0xff]
  %v68 = vld [vmem:[%s2 + $0x78] sm:$0xff]
  %69 = vmatprep.subr.mxu0 0.0
  %70 = vmatpush1.msra.mxu0 %v68
  %71 = vmatprep.subr.mxu0 0.0
  %72 = vmatpush1.msra.mxu0 %v67
  %73 = vmatprep.subr.mxu0 0.0
  %74 = vmatpush1.msra.mxu0 %v66
  %75 = vmatprep.subr.mxu0 0.0
  %76 = vmatpush1.msra.mxu0 %v65
  %77 = vmatprep.subr.mxu0 0.0
  %78 = vmatpush1.msra.mxu0 %v64
  %79 = vmatprep.subr.mxu0 0.0
  %80 = vmatpush1.msra.mxu0 %v63
  %81 = vmatprep.subr.mxu0 0.0
  %82 = vmatpush1.msra.mxu0 %v62
  %83 = vmatprep.subr.mxu0 0.0
  %84 = vmatpush1.msra.mxu0 %v61
  %85 = vmatprep.subr.mxu0 0.0
  %86 = vmatpush1.msra.mxu0 %v60
  %87 = vmatprep.subr.mxu0 0.0
  %88 = vmatpush1.msra.mxu0 %v59
  %89 = vmatprep.subr.mxu0 0.0
  %90 = vmatpush1.msra.mxu0 %v58
  %91 = vmatprep.subr.mxu0 0.0
  %92 = vmatpush1.msra.mxu0 %v57
  %93 = vmatprep.subr.mxu0 0.0
  %94 = vmatpush1.msra.mxu0 %v56
  %95 = vmatprep.subr.mxu0 0.0
  %96 = vmatpush1.msra.mxu0 %v55
  %97 = vmatprep.subr.mxu0 0.0
  %98 = vmatpush1.msra.mxu0 %v54
  %99 = vmatprep.subr.mxu0 0.0
  %100 = vmatpush1.msra.mxu0 %v53
  %101 = vmatprep.subr.mxu0 0.0
  %102 = vmatpush2.msra.mxu0 0.0
  %103 = vmatprep.subr.mxu0 0.0
  %104 = vmatpush2.msra.mxu0 0.0
  %105 = vmatprep.subr.mxu0 0.0
  %106 = vmatpush2.msra.mxu0 0.0
  %107 = vmatprep.subr.mxu0 0.0
  %108 = vmatpush2.msra.mxu0 0.0
  %109 = vmatprep.subr.mxu0 0.0
  %110 = vmatpush2.msra.mxu0 0.0
  %111 = vmatprep.subr.mxu0 0.0
  %112 = vmatpush2.msra.mxu0 0.0
  %113 = vmatprep.subr.mxu0 0.0
  %114 = vmatpush2.msra.mxu0 0.0
  %115 = vmatprep.subr.mxu0 0.0
  %116 = vmatpush2.msra.mxu0 0.0
  %117 = vmatprep.subr.mxu0 0.0
  %118 = vmatpush2.msra.mxu0 0.0
  %119 = vmatprep.subr.mxu0 0.0
  %120 = vmatpush2.msra.mxu0 0.0
  %121 = vmatprep.subr.mxu0 0.0
  %122 = vmatpush2.msra.mxu0 0.0
  %123 = vmatprep.subr.mxu0 0.0
  %124 = vmatpush2.msra.mxu0 0.0
  %125 = vmatprep.subr.mxu0 0.0
  %126 = vmatpush2.msra.mxu0 0.0
  %127 = vmatprep.subr.mxu0 0.0
  %128 = vmatpush2.msra.mxu0 0.0
  %129 = vmatprep.subr.mxu0 0.0
  %130 = vmatpush2.msra.mxu0 0.0
  %131 = vmatprep.subr.mxu0 0.0
  %132 = vmatpush2.msra.mxu0 0.0
  %133 = vmatprep.mubr.f32.mxu0 0.0
  %134 = vmatmul.mubr.f32.gmra.mxu0 %v51
  %v135 = vpop.f32.mrf.mxu0
  %v136 = vadd.f32 0.0, %v135
  %v137 = vpop.f32.mrf.mxu0
  %138 = vmatprep.mubr.f32.mxu0 0.0
  %139 = vmatmul.mubr.f32.gmra.mxu0 %v52
  %v140 = vpop.f32.mrf.mxu0
  %v141 = vadd.f32 0.0, %v140
  %v142 = vpop.f32.mrf.mxu0
  %143 = vdwg.mxu0
  %144 = vst [vmem:[%s3] sm:$0xff] %v136
  %145 = vst [vmem:[%s3 + $0x8] sm:$0xff] %v141
  // Predicated region
  $region14: #{node_embedding_forward.11} parent=0 // pred_check
    _
  $region15: #{node_embedding_forward.11} parent=0 // pred_check_branch
    %147 = sbr.rel (0) target = $region17
  $region16: #{node_embedding_forward.11} parent=0 // pred_region
    _
  $region17: #{node_embedding_forward.11} parent=0 // pred_fallthru
    _
  // Predicated region
  $region18: #{node_embedding_forward.11} parent=0 // pred_check
    _
  $region19: #{node_embedding_forward.11} parent=0 // pred_check_branch
    %149 = sbr.rel (0) target = $region21
  $region20: #{node_embedding_forward.11} parent=0 // pred_region
    _
  $region21: #{node_embedding_forward.11} parent=0 // pred_fallthru
    _

// kernel: node_embedding_forward.9
$region0: #{node_embedding_forward.9}
  #allocation0 [shape = 'u32[]', space=smem, size = 0x4, offset = 0x4, fixed_abs, tag = 'smem constant byte address 0x4 - core index']
  #allocation1 [shape = 'u32[144,128]{1,0:T(1,128)}', space=vmem, size = 0x12000, scoped, tag = 'internal scratch']
  %s0 = inlined_call_operand.vmem [shape: f32[16,128], index: 0, kind: input, shape index: {}]
  %s1 = inlined_call_operand.vmem [shape: f32[128,128], index: 1, kind: input, shape index: {}]
  %s2 = inlined_call_operand.vmem [shape: f32[1,128], index: 2, kind: input, shape index: {}]
  %s3 = inlined_call_operand.vmem [shape: f32[16,128], index: 3, kind: output, shape index: {}]
  %s4 = sld [smem:[#allocation0]]
  $region22: #{node_embedding_forward.9} parent=0
    _
  %s6 = ssub.s32 1, %s4
  %s7 = scalar_select 0, %s6, %s4
  // Predicated region
  $region2: #{node_embedding_forward.9} parent=0 // pred_check
    _
  $region3: #{node_embedding_forward.9} parent=0 // pred_check_branch
    %9 = sbr.rel (0) target = $region5
  $region4: #{node_embedding_forward.9} parent=0 // pred_region
    _
  $region5: #{node_embedding_forward.9} parent=0 // pred_fallthru
    _
  // Predicated region
  $region6: #{node_embedding_forward.9} parent=0 // pred_check
    _
  $region7: #{node_embedding_forward.9} parent=0 // pred_check_branch
    %11 = sbr.rel (0) target = $region9
  $region8: #{node_embedding_forward.9} parent=0 // pred_region
    _
  $region9: #{node_embedding_forward.9} parent=0 // pred_fallthru
    _
  // Predicated region
  $region10: #{node_embedding_forward.9} parent=0 // pred_check
    _
  $region11: #{node_embedding_forward.9} parent=0 // pred_check_branch
    %13 = sbr.rel (0) target = $region13
  $region12: #{node_embedding_forward.9} parent=0 // pred_region
    _
  $region13: #{node_embedding_forward.9} parent=0 // pred_fallthru
    _
  %v14 = vld [vmem:[%s0] sm:$0xff]
  %v15 = vld [vmem:[%s0 + $0x8] sm:$0xff]
  %v16 = vld [vmem:[%s1] sm:$0xff]
  %v17 = vld [vmem:[%s1 + $0x8] sm:$0xff]
  %v18 = vld [vmem:[%s1 + $0x10] sm:$0xff]
  %v19 = vld [vmem:[%s1 + $0x18] sm:$0xff]
  %v20 = vld [vmem:[%s1 + $0x20] sm:$0xff]
  %v21 = vld [vmem:[%s1 + $0x28] sm:$0xff]
  %v22 = vld [vmem:[%s1 + $0x30] sm:$0xff]
  %v23 = vld [vmem:[%s1 + $0x38] sm:$0xff]
  %v24 = vld [vmem:[%s1 + $0x40] sm:$0xff]
  %v25 = vld [vmem:[%s1 + $0x48] sm:$0xff]
  %v26 = vld [vmem:[%s1 + $0x50] sm:$0xff]
  %v27 = vld [vmem:[%s1 + $0x58] sm:$0xff]
  %v28 = vld [vmem:[%s1 + $0x60] sm:$0xff]
  %v29 = vld [vmem:[%s1 + $0x68] sm:$0xff]
  %v30 = vld [vmem:[%s1 + $0x70] sm:$0xff]
  %v31 = vld [vmem:[%s1 + $0x78] sm:$0xff]
  %v32 = vld [vmem:[%s2] sm:$0x1]
  %v34 = vlaneseq
  %v35 = vshrl.u32 %v34, 7
  %v36 = vsub.s32 0, %v35
  %v37 = vrot.slane %v32, %v36
  %39 = vmatprep.subr.mxu0 0.0
  %40 = vmatpush1.msra.mxu0 %v31
  %41 = vmatprep.subr.mxu0 0.0
  %42 = vmatpush1.msra.mxu0 %v30
  %43 = vmatprep.subr.mxu0 0.0
  %44 = vmatpush1.msra.mxu0 %v29
  %45 = vmatprep.subr.mxu0 0.0
  %46 = vmatpush1.msra.mxu0 %v28
  %47 = vmatprep.subr.mxu0 0.0
  %48 = vmatpush1.msra.mxu0 %v27
  %49 = vmatprep.subr.mxu0 0.0
  %50 = vmatpush1.msra.mxu0 %v26
  %51 = vmatprep.subr.mxu0 0.0
  %52 = vmatpush1.msra.mxu0 %v25
  %53 = vmatprep.subr.mxu0 0.0
  %54 = vmatpush1.msra.mxu0 %v24
  %55 = vmatprep.subr.mxu0 0.0
  %56 = vmatpush1.msra.mxu0 %v23
  %57 = vmatprep.subr.mxu0 0.0
  %58 = vmatpush1.msra.mxu0 %v22
  %59 = vmatprep.subr.mxu0 0.0
  %60 = vmatpush1.msra.mxu0 %v21
  %61 = vmatprep.subr.mxu0 0.0
  %62 = vmatpush1.msra.mxu0 %v20
  %63 = vmatprep.subr.mxu0 0.0
  %64 = vmatpush1.msra.mxu0 %v19
  %65 = vmatprep.subr.mxu0 0.0
  %66 = vmatpush1.msra.mxu0 %v18
  %67 = vmatprep.subr.mxu0 0.0
  %68 = vmatpush1.msra.mxu0 %v17
  %69 = vmatprep.subr.mxu0 0.0
  %70 = vmatpush1.msra.mxu0 %v16
  %71 = vmatprep.subr.mxu0 0.0
  %72 = vmatpush2.msra.mxu0 0.0
  %73 = vmatprep.subr.mxu0 0.0
  %74 = vmatpush2.msra.mxu0 0.0
  %75 = vmatprep.subr.mxu0 0.0
  %76 = vmatpush2.msra.mxu0 0.0
  %77 = vmatprep.subr.mxu0 0.0
  %78 = vmatpush2.msra.mxu0 0.0
  %79 = vmatprep.subr.mxu0 0.0
  %80 = vmatpush2.msra.mxu0 0.0
  %81 = vmatprep.subr.mxu0 0.0
  %82 = vmatpush2.msra.mxu0 0.0
  %83 = vmatprep.subr.mxu0 0.0
  %84 = vmatpush2.msra.mxu0 0.0
  %85 = vmatprep.subr.mxu0 0.0
  %86 = vmatpush2.msra.mxu0 0.0
  %87 = vmatprep.subr.mxu0 0.0
  %88 = vmatpush2.msra.mxu0 0.0
  %89 = vmatprep.subr.mxu0 0.0
  %90 = vmatpush2.msra.mxu0 0.0
  %91 = vmatprep.subr.mxu0 0.0
  %92 = vmatpush2.msra.mxu0 0.0
  %93 = vmatprep.subr.mxu0 0.0
  %94 = vmatpush2.msra.mxu0 0.0
  %95 = vmatprep.subr.mxu0 0.0
  %96 = vmatpush2.msra.mxu0 0.0
  %97 = vmatprep.subr.mxu0 0.0
  %98 = vmatpush2.msra.mxu0 0.0
  %99 = vmatprep.subr.mxu0 0.0
  %100 = vmatpush2.msra.mxu0 0.0
  %101 = vmatprep.subr.mxu0 0.0
  %102 = vmatpush2.msra.mxu0 0.0
  %103 = vmatprep.mubr.f32.mxu0 0.0
  %104 = vmatmul.mubr.f32.gmra.mxu0 %v14
  %v105 = vpop.f32.mrf.mxu0
  %v106 = vadd.f32 %v37, %v105
  %v107 = vpop.f32.mrf.mxu0
  %108 = vmatprep.mubr.f32.mxu0 0.0
  %109 = vmatmul.mubr.f32.gmra.mxu0 %v15
  %v110 = vpop.f32.mrf.mxu0
  %v111 = vadd.f32 %v37, %v110
  %v112 = vpop.f32.mrf.mxu0
  %113 = vdwg.mxu0
  %v114 = vmax.f32 %v106, 0.0
  %v115 = vmax.f32 %v111, 0.0
  %116 = vst [vmem:[%s3] sm:$0xff] %v114
  %117 = vst [vmem:[%s3 + $0x8] sm:$0xff] %v115
  // Predicated region
  $region14: #{node_embedding_forward.9} parent=0 // pred_check
    _
  $region15: #{node_embedding_forward.9} parent=0 // pred_check_branch
    %119 = sbr.rel (0) target = $region17
  $region16: #{node_embedding_forward.9} parent=0 // pred_region
    _
  $region17: #{node_embedding_forward.9} parent=0 // pred_fallthru
    _
  // Predicated region
  $region18: #{node_embedding_forward.9} parent=0 // pred_check
    _
  $region19: #{node_embedding_forward.9} parent=0 // pred_check_branch
    %121 = sbr.rel (0) target = $region21
  $region20: #{node_embedding_forward.9} parent=0 // pred_region
    _
  $region21: #{node_embedding_forward.9} parent=0 // pred_fallthru
    _

// kernel: node_embedding_forward.12
$region0: #{node_embedding_forward.12}
  #allocation0 [shape = 'u32[]', space=smem, size = 0x4, offset = 0x4, fixed_abs, tag = 'smem constant byte address 0x4 - core index']
  #allocation1 [shape = 'u32[144,128]{1,0:T(1,128)}', space=vmem, size = 0x12000, scoped, tag = 'internal scratch']
  %s0 = inlined_call_operand.vmem [shape: f32[16,128], index: 0, kind: input, shape index: {}]
  %s1 = inlined_call_operand.vmem [shape: f32[128,128], index: 1, kind: input, shape index: {}]
  %s2 = inlined_call_operand.vmem [shape: f32[1,128], index: 2, kind: input, shape index: {}]
  %s3 = inlined_call_operand.vmem [shape: f32[16,128], index: 3, kind: output, shape index: {}]
  %s4 = sld [smem:[#allocation0]]
  $region22: #{node_embedding_forward.12} parent=0
    _
  %s6 = ssub.s32 1, %s4
  %s7 = scalar_select 0, %s6, %s4
  // Predicated region
  $region2: #{node_embedding_forward.12} parent=0 // pred_check
    _
  $region3: #{node_embedding_forward.12} parent=0 // pred_check_branch
    %9 = sbr.rel (0) target = $region5
  $region4: #{node_embedding_forward.12} parent=0 // pred_region
    _
  $region5: #{node_embedding_forward.12} parent=0 // pred_fallthru
    _
  // Predicated region
  $region6: #{node_embedding_forward.12} parent=0 // pred_check
    _
  $region7: #{node_embedding_forward.12} parent=0 // pred_check_branch
    %11 = sbr.rel (0) target = $region9
  $region8: #{node_embedding_forward.12} parent=0 // pred_region
    _
  $region9: #{node_embedding_forward.12} parent=0 // pred_fallthru
    _
  // Predicated region
  $region10: #{node_embedding_forward.12} parent=0 // pred_check
    _
  $region11: #{node_embedding_forward.12} parent=0 // pred_check_branch
    %13 = sbr.rel (0) target = $region13
  $region12: #{node_embedding_forward.12} parent=0 // pred_region
    _
  $region13: #{node_embedding_forward.12} parent=0 // pred_fallthru
    _
  %v14 = vld [vmem:[%s0] sm:$0xff]
  %v15 = vld [vmem:[%s0 + $0x8] sm:$0xff]
  %v16 = vld [vmem:[%s1] sm:$0xff]
  %v17 = vld [vmem:[%s1 + $0x8] sm:$0xff]
  %v18 = vld [vmem:[%s1 + $0x10] sm:$0xff]
  %v19 = vld [vmem:[%s1 + $0x18] sm:$0xff]
  %v20 = vld [vmem:[%s1 + $0x20] sm:$0xff]
  %v21 = vld [vmem:[%s1 + $0x28] sm:$0xff]
  %v22 = vld [vmem:[%s1 + $0x30] sm:$0xff]
  %v23 = vld [vmem:[%s1 + $0x38] sm:$0xff]
  %v24 = vld [vmem:[%s1 + $0x40] sm:$0xff]
  %v25 = vld [vmem:[%s1 + $0x48] sm:$0xff]
  %v26 = vld [vmem:[%s1 + $0x50] sm:$0xff]
  %v27 = vld [vmem:[%s1 + $0x58] sm:$0xff]
  %v28 = vld [vmem:[%s1 + $0x60] sm:$0xff]
  %v29 = vld [vmem:[%s1 + $0x68] sm:$0xff]
  %v30 = vld [vmem:[%s1 + $0x70] sm:$0xff]
  %v31 = vld [vmem:[%s1 + $0x78] sm:$0xff]
  %v32 = vld [vmem:[%s2] sm:$0x1]
  %v34 = vlaneseq
  %v35 = vshrl.u32 %v34, 7
  %v36 = vsub.s32 0, %v35
  %v37 = vrot.slane %v32, %v36
  %39 = vmatprep.subr.mxu0 0.0
  %40 = vmatpush1.msra.mxu0 %v31
  %41 = vmatprep.subr.mxu0 0.0
  %42 = vmatpush1.msra.mxu0 %v30
  %43 = vmatprep.subr.mxu0 0.0
  %44 = vmatpush1.msra.mxu0 %v29
  %45 = vmatprep.subr.mxu0 0.0
  %46 = vmatpush1.msra.mxu0 %v28
  %47 = vmatprep.subr.mxu0 0.0
  %48 = vmatpush1.msra.mxu0 %v27
  %49 = vmatprep.subr.mxu0 0.0
  %50 = vmatpush1.msra.mxu0 %v26
  %51 = vmatprep.subr.mxu0 0.0
  %52 = vmatpush1.msra.mxu0 %v25
  %53 = vmatprep.subr.mxu0 0.0
  %54 = vmatpush1.msra.mxu0 %v24
  %55 = vmatprep.subr.mxu0 0.0
  %56 = vmatpush1.msra.mxu0 %v23
  %57 = vmatprep.subr.mxu0 0.0
  %58 = vmatpush1.msra.mxu0 %v22
  %59 = vmatprep.subr.mxu0 0.0
  %60 = vmatpush1.msra.mxu0 %v21
  %61 = vmatprep.subr.mxu0 0.0
  %62 = vmatpush1.msra.mxu0 %v20
  %63 = vmatprep.subr.mxu0 0.0
  %64 = vmatpush1.msra.mxu0 %v19
  %65 = vmatprep.subr.mxu0 0.0
  %66 = vmatpush1.msra.mxu0 %v18
  %67 = vmatprep.subr.mxu0 0.0
  %68 = vmatpush1.msra.mxu0 %v17
  %69 = vmatprep.subr.mxu0 0.0
  %70 = vmatpush1.msra.mxu0 %v16
  %71 = vmatprep.subr.mxu0 0.0
  %72 = vmatpush2.msra.mxu0 0.0
  %73 = vmatprep.subr.mxu0 0.0
  %74 = vmatpush2.msra.mxu0 0.0
  %75 = vmatprep.subr.mxu0 0.0
  %76 = vmatpush2.msra.mxu0 0.0
  %77 = vmatprep.subr.mxu0 0.0
  %78 = vmatpush2.msra.mxu0 0.0
  %79 = vmatprep.subr.mxu0 0.0
  %80 = vmatpush2.msra.mxu0 0.0
  %81 = vmatprep.subr.mxu0 0.0
  %82 = vmatpush2.msra.mxu0 0.0
  %83 = vmatprep.subr.mxu0 0.0
  %84 = vmatpush2.msra.mxu0 0.0
  %85 = vmatprep.subr.mxu0 0.0
  %86 = vmatpush2.msra.mxu0 0.0
  %87 = vmatprep.subr.mxu0 0.0
  %88 = vmatpush2.msra.mxu0 0.0
  %89 = vmatprep.subr.mxu0 0.0
  %90 = vmatpush2.msra.mxu0 0.0
  %91 = vmatprep.subr.mxu0 0.0
  %92 = vmatpush2.msra.mxu0 0.0
  %93 = vmatprep.subr.mxu0 0.0
  %94 = vmatpush2.msra.mxu0 0.0
  %95 = vmatprep.subr.mxu0 0.0
  %96 = vmatpush2.msra.mxu0 0.0
  %97 = vmatprep.subr.mxu0 0.0
  %98 = vmatpush2.msra.mxu0 0.0
  %99 = vmatprep.subr.mxu0 0.0
  %100 = vmatpush2.msra.mxu0 0.0
  %101 = vmatprep.subr.mxu0 0.0
  %102 = vmatpush2.msra.mxu0 0.0
  %103 = vmatprep.mubr.f32.mxu0 0.0
  %104 = vmatmul.mubr.f32.gmra.mxu0 %v14
  %v105 = vpop.f32.mrf.mxu0
  %v106 = vadd.f32 %v37, %v105
  %v107 = vpop.f32.mrf.mxu0
  %108 = vmatprep.mubr.f32.mxu0 0.0
  %109 = vmatmul.mubr.f32.gmra.mxu0 %v15
  %v110 = vpop.f32.mrf.mxu0
  %v111 = vadd.f32 %v37, %v110
  %v112 = vpop.f32.mrf.mxu0
  %113 = vdwg.mxu0
  %v114 = vmax.f32 %v106, 0.0
  %v115 = vmax.f32 %v111, 0.0
  %116 = vst [vmem:[%s3] sm:$0xff] %v114
  %117 = vst [vmem:[%s3 + $0x8] sm:$0xff] %v115
  // Predicated region
  $region14: #{node_embedding_forward.12} parent=0 // pred_check
    _
  $region15: #{node_embedding_forward.12} parent=0 // pred_check_branch
    %119 = sbr.rel (0) target = $region17
  $region16: #{node_embedding_forward.12} parent=0 // pred_region
    _
  $region17: #{node_embedding_forward.12} parent=0 // pred_fallthru
    _
  // Predicated region
  $region18: #{node_embedding_forward.12} parent=0 // pred_check
    _
  $region19: #{node_embedding_forward.12} parent=0 // pred_check_branch
    %121 = sbr.rel (0) target = $region21
  $region20: #{node_embedding_forward.12} parent=0 // pred_region
    _
  $region21: #{node_embedding_forward.12} parent=0 // pred_fallthru
    _

// kernel: node_embedding_forward.13
$region0: #{node_embedding_forward.13}
  #allocation0 [shape = 'u32[]', space=smem, size = 0x4, offset = 0x4, fixed_abs, tag = 'smem constant byte address 0x4 - core index']
  #allocation1 [shape = 'u32[144,128]{1,0:T(1,128)}', space=vmem, size = 0x12000, scoped, tag = 'internal scratch']
  %s0 = inlined_call_operand.vmem [shape: f32[16,128], index: 0, kind: input, shape index: {}]
  %s1 = inlined_call_operand.vmem [shape: f32[128,128], index: 1, kind: input, shape index: {}]
  %s2 = inlined_call_operand.vmem [shape: f32[1,128], index: 2, kind: input, shape index: {}]
  %s3 = inlined_call_operand.vmem [shape: f32[16,128], index: 3, kind: output, shape index: {}]
  %s4 = sld [smem:[#allocation0]]
  $region22: #{node_embedding_forward.13} parent=0
    _
  %s6 = ssub.s32 1, %s4
  %s7 = scalar_select 0, %s6, %s4
  // Predicated region
  $region2: #{node_embedding_forward.13} parent=0 // pred_check
    _
  $region3: #{node_embedding_forward.13} parent=0 // pred_check_branch
    %9 = sbr.rel (0) target = $region5
  $region4: #{node_embedding_forward.13} parent=0 // pred_region
    _
  $region5: #{node_embedding_forward.13} parent=0 // pred_fallthru
    _
  // Predicated region
  $region6: #{node_embedding_forward.13} parent=0 // pred_check
    _
  $region7: #{node_embedding_forward.13} parent=0 // pred_check_branch
    %11 = sbr.rel (0) target = $region9
  $region8: #{node_embedding_forward.13} parent=0 // pred_region
    _
  $region9: #{node_embedding_forward.13} parent=0 // pred_fallthru
    _
  // Predicated region
  $region10: #{node_embedding_forward.13} parent=0 // pred_check
    _
  $region11: #{node_embedding_forward.13} parent=0 // pred_check_branch
    %13 = sbr.rel (0) target = $region13
  $region12: #{node_embedding_forward.13} parent=0 // pred_region
    _
  $region13: #{node_embedding_forward.13} parent=0 // pred_fallthru
    _
  %v14 = vld [vmem:[%s0] sm:$0xff]
  %v15 = vld [vmem:[%s0 + $0x8] sm:$0xff]
  %v16 = vld [vmem:[%s1] sm:$0xff]
  %v17 = vld [vmem:[%s1 + $0x8] sm:$0xff]
  %v18 = vld [vmem:[%s1 + $0x10] sm:$0xff]
  %v19 = vld [vmem:[%s1 + $0x18] sm:$0xff]
  %v20 = vld [vmem:[%s1 + $0x20] sm:$0xff]
  %v21 = vld [vmem:[%s1 + $0x28] sm:$0xff]
  %v22 = vld [vmem:[%s1 + $0x30] sm:$0xff]
  %v23 = vld [vmem:[%s1 + $0x38] sm:$0xff]
  %v24 = vld [vmem:[%s1 + $0x40] sm:$0xff]
  %v25 = vld [vmem:[%s1 + $0x48] sm:$0xff]
  %v26 = vld [vmem:[%s1 + $0x50] sm:$0xff]
  %v27 = vld [vmem:[%s1 + $0x58] sm:$0xff]
  %v28 = vld [vmem:[%s1 + $0x60] sm:$0xff]
  %v29 = vld [vmem:[%s1 + $0x68] sm:$0xff]
  %v30 = vld [vmem:[%s1 + $0x70] sm:$0xff]
  %v31 = vld [vmem:[%s1 + $0x78] sm:$0xff]
  %v32 = vld [vmem:[%s2] sm:$0x1]
  %v34 = vlaneseq
  %v35 = vshrl.u32 %v34, 7
  %v36 = vsub.s32 0, %v35
  %v37 = vrot.slane %v32, %v36
  %39 = vmatprep.subr.mxu0 0.0
  %40 = vmatpush1.msra.mxu0 %v31
  %41 = vmatprep.subr.mxu0 0.0
  %42 = vmatpush1.msra.mxu0 %v30
  %43 = vmatprep.subr.mxu0 0.0
  %44 = vmatpush1.msra.mxu0 %v29
  %45 = vmatprep.subr.mxu0 0.0
  %46 = vmatpush1.msra.mxu0 %v28
  %47 = vmatprep.subr.mxu0 0.0
  %48 = vmatpush1.msra.mxu0 %v27
  %49 = vmatprep.subr.mxu0 0.0
  %50 = vmatpush1.msra.mxu0 %v26
  %51 = vmatprep.subr.mxu0 0.0
  %52 = vmatpush1.msra.mxu0 %v25
  %53 = vmatprep.subr.mxu0 0.0
  %54 = vmatpush1.msra.mxu0 %v24
  %55 = vmatprep.subr.mxu0 0.0
  %56 = vmatpush1.msra.mxu0 %v23
  %57 = vmatprep.subr.mxu0 0.0
  %58 = vmatpush1.msra.mxu0 %v22
  %59 = vmatprep.subr.mxu0 0.0
  %60 = vmatpush1.msra.mxu0 %v21
  %61 = vmatprep.subr.mxu0 0.0
  %62 = vmatpush1.msra.mxu0 %v20
  %63 = vmatprep.subr.mxu0 0.0
  %64 = vmatpush1.msra.mxu0 %v19
  %65 = vmatprep.subr.mxu0 0.0
  %66 = vmatpush1.msra.mxu0 %v18
  %67 = vmatprep.subr.mxu0 0.0
  %68 = vmatpush1.msra.mxu0 %v17
  %69 = vmatprep.subr.mxu0 0.0
  %70 = vmatpush1.msra.mxu0 %v16
  %71 = vmatprep.subr.mxu0 0.0
  %72 = vmatpush2.msra.mxu0 0.0
  %73 = vmatprep.subr.mxu0 0.0
  %74 = vmatpush2.msra.mxu0 0.0
  %75 = vmatprep.subr.mxu0 0.0
  %76 = vmatpush2.msra.mxu0 0.0
  %77 = vmatprep.subr.mxu0 0.0
  %78 = vmatpush2.msra.mxu0 0.0
  %79 = vmatprep.subr.mxu0 0.0
  %80 = vmatpush2.msra.mxu0 0.0
  %81 = vmatprep.subr.mxu0 0.0
  %82 = vmatpush2.msra.mxu0 0.0
  %83 = vmatprep.subr.mxu0 0.0
  %84 = vmatpush2.msra.mxu0 0.0
  %85 = vmatprep.subr.mxu0 0.0
  %86 = vmatpush2.msra.mxu0 0.0
  %87 = vmatprep.subr.mxu0 0.0
  %88 = vmatpush2.msra.mxu0 0.0
  %89 = vmatprep.subr.mxu0 0.0
  %90 = vmatpush2.msra.mxu0 0.0
  %91 = vmatprep.subr.mxu0 0.0
  %92 = vmatpush2.msra.mxu0 0.0
  %93 = vmatprep.subr.mxu0 0.0
  %94 = vmatpush2.msra.mxu0 0.0
  %95 = vmatprep.subr.mxu0 0.0
  %96 = vmatpush2.msra.mxu0 0.0
  %97 = vmatprep.subr.mxu0 0.0
  %98 = vmatpush2.msra.mxu0 0.0
  %99 = vmatprep.subr.mxu0 0.0
  %100 = vmatpush2.msra.mxu0 0.0
  %101 = vmatprep.subr.mxu0 0.0
  %102 = vmatpush2.msra.mxu0 0.0
  %103 = vmatprep.mubr.f32.mxu0 0.0
  %104 = vmatmul.mubr.f32.gmra.mxu0 %v14
  %v105 = vpop.f32.mrf.mxu0
  %v106 = vadd.f32 %v37, %v105
  %v107 = vpop.f32.mrf.mxu0
  %108 = vmatprep.mubr.f32.mxu0 0.0
  %109 = vmatmul.mubr.f32.gmra.mxu0 %v15
  %v110 = vpop.f32.mrf.mxu0
  %v111 = vadd.f32 %v37, %v110
  %v112 = vpop.f32.mrf.mxu0
  %113 = vdwg.mxu0
  %v114 = vmax.f32 %v106, 0.0
  %v115 = vmax.f32 %v111, 0.0
  %116 = vst [vmem:[%s3] sm:$0xff] %v114
  %117 = vst [vmem:[%s3 + $0x8] sm:$0xff] %v115
  // Predicated region
  $region14: #{node_embedding_forward.13} parent=0 // pred_check
    _
  $region15: #{node_embedding_forward.13} parent=0 // pred_check_branch
    %119 = sbr.rel (0) target = $region17
  $region16: #{node_embedding_forward.13} parent=0 // pred_region
    _
  $region17: #{node_embedding_forward.13} parent=0 // pred_fallthru
    _
  // Predicated region
  $region18: #{node_embedding_forward.13} parent=0 // pred_check
    _
  $region19: #{node_embedding_forward.13} parent=0 // pred_check_branch
    %121 = sbr.rel (0) target = $region21
  $region20: #{node_embedding_forward.13} parent=0 // pred_region
    _
  $region21: #{node_embedding_forward.13} parent=0 // pred_fallthru
    _

// kernel: node_embedding_forward.16
$region0: #{node_embedding_forward.16}
  #allocation0 [shape = 'u32[]', space=smem, size = 0x4, offset = 0x4, fixed_abs, tag = 'smem constant byte address 0x4 - core index']
  #allocation1 [shape = 'u32[144,128]{1,0:T(1,128)}', space=vmem, size = 0x12000, scoped, tag = 'internal scratch']
  %s0 = inlined_call_operand.vmem [shape: f32[16,128], index: 0, kind: input, shape index: {}]
  %s1 = inlined_call_operand.vmem [shape: f32[128,128], index: 1, kind: input, shape index: {}]
  %s2 = inlined_call_operand.vmem [shape: f32[1,128], index: 2, kind: input, shape index: {}]
  %s3 = inlined_call_operand.vmem [shape: f32[16,128], index: 3, kind: output, shape index: {}]
  %s4 = sld [smem:[#allocation0]]
  $region22: #{node_embedding_forward.16} parent=0
    _
  %s6 = ssub.s32 1, %s4
  %s7 = scalar_select 0, %s6, %s4
  // Predicated region
  $region2: #{node_embedding_forward.16} parent=0 // pred_check
    _
  $region3: #{node_embedding_forward.16} parent=0 // pred_check_branch
    %9 = sbr.rel (0) target = $region5
  $region4: #{node_embedding_forward.16} parent=0 // pred_region
    _
  $region5: #{node_embedding_forward.16} parent=0 // pred_fallthru
    _
  // Predicated region
  $region6: #{node_embedding_forward.16} parent=0 // pred_check
    _
  $region7: #{node_embedding_forward.16} parent=0 // pred_check_branch
    %11 = sbr.rel (0) target = $region9
  $region8: #{node_embedding_forward.16} parent=0 // pred_region
    _
  $region9: #{node_embedding_forward.16} parent=0 // pred_fallthru
    _
  // Predicated region
  $region10: #{node_embedding_forward.16} parent=0 // pred_check
    _
  $region11: #{node_embedding_forward.16} parent=0 // pred_check_branch
    %13 = sbr.rel (0) target = $region13
  $region12: #{node_embedding_forward.16} parent=0 // pred_region
    _
  $region13: #{node_embedding_forward.16} parent=0 // pred_fallthru
    _
  %v14 = vld [vmem:[%s0] sm:$0xff]
  %v15 = vld [vmem:[%s0 + $0x8] sm:$0xff]
  %v16 = vld [vmem:[%s1] sm:$0xff]
  %v17 = vld [vmem:[%s1 + $0x8] sm:$0xff]
  %v18 = vld [vmem:[%s1 + $0x10] sm:$0xff]
  %v19 = vld [vmem:[%s1 + $0x18] sm:$0xff]
  %v20 = vld [vmem:[%s1 + $0x20] sm:$0xff]
  %v21 = vld [vmem:[%s1 + $0x28] sm:$0xff]
  %v22 = vld [vmem:[%s1 + $0x30] sm:$0xff]
  %v23 = vld [vmem:[%s1 + $0x38] sm:$0xff]
  %v24 = vld [vmem:[%s1 + $0x40] sm:$0xff]
  %v25 = vld [vmem:[%s1 + $0x48] sm:$0xff]
  %v26 = vld [vmem:[%s1 + $0x50] sm:$0xff]
  %v27 = vld [vmem:[%s1 + $0x58] sm:$0xff]
  %v28 = vld [vmem:[%s1 + $0x60] sm:$0xff]
  %v29 = vld [vmem:[%s1 + $0x68] sm:$0xff]
  %v30 = vld [vmem:[%s1 + $0x70] sm:$0xff]
  %v31 = vld [vmem:[%s1 + $0x78] sm:$0xff]
  %v32 = vld [vmem:[%s2] sm:$0x1]
  %v34 = vlaneseq
  %v35 = vshrl.u32 %v34, 7
  %v36 = vsub.s32 0, %v35
  %v37 = vrot.slane %v32, %v36
  %39 = vmatprep.subr.mxu0 0.0
  %40 = vmatpush1.msra.mxu0 %v31
  %41 = vmatprep.subr.mxu0 0.0
  %42 = vmatpush1.msra.mxu0 %v30
  %43 = vmatprep.subr.mxu0 0.0
  %44 = vmatpush1.msra.mxu0 %v29
  %45 = vmatprep.subr.mxu0 0.0
  %46 = vmatpush1.msra.mxu0 %v28
  %47 = vmatprep.subr.mxu0 0.0
  %48 = vmatpush1.msra.mxu0 %v27
  %49 = vmatprep.subr.mxu0 0.0
  %50 = vmatpush1.msra.mxu0 %v26
  %51 = vmatprep.subr.mxu0 0.0
  %52 = vmatpush1.msra.mxu0 %v25
  %53 = vmatprep.subr.mxu0 0.0
  %54 = vmatpush1.msra.mxu0 %v24
  %55 = vmatprep.subr.mxu0 0.0
  %56 = vmatpush1.msra.mxu0 %v23
  %57 = vmatprep.subr.mxu0 0.0
  %58 = vmatpush1.msra.mxu0 %v22
  %59 = vmatprep.subr.mxu0 0.0
  %60 = vmatpush1.msra.mxu0 %v21
  %61 = vmatprep.subr.mxu0 0.0
  %62 = vmatpush1.msra.mxu0 %v20
  %63 = vmatprep.subr.mxu0 0.0
  %64 = vmatpush1.msra.mxu0 %v19
  %65 = vmatprep.subr.mxu0 0.0
  %66 = vmatpush1.msra.mxu0 %v18
  %67 = vmatprep.subr.mxu0 0.0
  %68 = vmatpush1.msra.mxu0 %v17
  %69 = vmatprep.subr.mxu0 0.0
  %70 = vmatpush1.msra.mxu0 %v16
  %71 = vmatprep.subr.mxu0 0.0
  %72 = vmatpush2.msra.mxu0 0.0
  %73 = vmatprep.subr.mxu0 0.0
  %74 = vmatpush2.msra.mxu0 0.0
  %75 = vmatprep.subr.mxu0 0.0
  %76 = vmatpush2.msra.mxu0 0.0
  %77 = vmatprep.subr.mxu0 0.0
  %78 = vmatpush2.msra.mxu0 0.0
  %79 = vmatprep.subr.mxu0 0.0
  %80 = vmatpush2.msra.mxu0 0.0
  %81 = vmatprep.subr.mxu0 0.0
  %82 = vmatpush2.msra.mxu0 0.0
  %83 = vmatprep.subr.mxu0 0.0
  %84 = vmatpush2.msra.mxu0 0.0
  %85 = vmatprep.subr.mxu0 0.0
  %86 = vmatpush2.msra.mxu0 0.0
  %87 = vmatprep.subr.mxu0 0.0
  %88 = vmatpush2.msra.mxu0 0.0
  %89 = vmatprep.subr.mxu0 0.0
  %90 = vmatpush2.msra.mxu0 0.0
  %91 = vmatprep.subr.mxu0 0.0
  %92 = vmatpush2.msra.mxu0 0.0
  %93 = vmatprep.subr.mxu0 0.0
  %94 = vmatpush2.msra.mxu0 0.0
  %95 = vmatprep.subr.mxu0 0.0
  %96 = vmatpush2.msra.mxu0 0.0
  %97 = vmatprep.subr.mxu0 0.0
  %98 = vmatpush2.msra.mxu0 0.0
  %99 = vmatprep.subr.mxu0 0.0
  %100 = vmatpush2.msra.mxu0 0.0
  %101 = vmatprep.subr.mxu0 0.0
  %102 = vmatpush2.msra.mxu0 0.0
  %103 = vmatprep.mubr.f32.mxu0 0.0
  %104 = vmatmul.mubr.f32.gmra.mxu0 %v14
  %v105 = vpop.f32.mrf.mxu0
  %v106 = vadd.f32 %v37, %v105
  %v107 = vpop.f32.mrf.mxu0
  %108 = vmatprep.mubr.f32.mxu0 0.0
  %109 = vmatmul.mubr.f32.gmra.mxu0 %v15
  %v110 = vpop.f32.mrf.mxu0
  %v111 = vadd.f32 %v37, %v110
  %v112 = vpop.f32.mrf.mxu0
  %113 = vdwg.mxu0
  %v114 = vmax.f32 %v106, 0.0
  %v115 = vmax.f32 %v111, 0.0
  %116 = vst [vmem:[%s3] sm:$0xff] %v114
  %117 = vst [vmem:[%s3 + $0x8] sm:$0xff] %v115
  // Predicated region
  $region14: #{node_embedding_forward.16} parent=0 // pred_check
    _
  $region15: #{node_embedding_forward.16} parent=0 // pred_check_branch
    %119 = sbr.rel (0) target = $region17
  $region16: #{node_embedding_forward.16} parent=0 // pred_region
    _
  $region17: #{node_embedding_forward.16} parent=0 // pred_fallthru
    _
  // Predicated region
  $region18: #{node_embedding_forward.16} parent=0 // pred_check
    _
  $region19: #{node_embedding_forward.16} parent=0 // pred_check_branch
    %121 = sbr.rel (0) target = $region21
  $region20: #{node_embedding_forward.16} parent=0 // pred_region
    _
  $region21: #{node_embedding_forward.16} parent=0 // pred_fallthru
    _

// kernel: node_embedding_forward.14
$region0: #{node_embedding_forward.14}
  #allocation0 [shape = 'u32[]', space=smem, size = 0x4, offset = 0x4, fixed_abs, tag = 'smem constant byte address 0x4 - core index']
  #allocation1 [shape = 'u32[144,128]{1,0:T(1,128)}', space=vmem, size = 0x12000, scoped, tag = 'internal scratch']
  %s0 = inlined_call_operand.vmem [shape: f32[16,128], index: 0, kind: input, shape index: {}]
  %s1 = inlined_call_operand.vmem [shape: f32[128,128], index: 1, kind: input, shape index: {}]
  %s2 = inlined_call_operand.vmem [shape: f32[1,128], index: 2, kind: input, shape index: {}]
  %s3 = inlined_call_operand.vmem [shape: f32[16,128], index: 3, kind: output, shape index: {}]
  %s4 = sld [smem:[#allocation0]]
  $region22: #{node_embedding_forward.14} parent=0
    _
  %s6 = ssub.s32 1, %s4
  %s7 = scalar_select 0, %s6, %s4
  // Predicated region
  $region2: #{node_embedding_forward.14} parent=0 // pred_check
    _
  $region3: #{node_embedding_forward.14} parent=0 // pred_check_branch
    %9 = sbr.rel (0) target = $region5
  $region4: #{node_embedding_forward.14} parent=0 // pred_region
    _
  $region5: #{node_embedding_forward.14} parent=0 // pred_fallthru
    _
  // Predicated region
  $region6: #{node_embedding_forward.14} parent=0 // pred_check
    _
  $region7: #{node_embedding_forward.14} parent=0 // pred_check_branch
    %11 = sbr.rel (0) target = $region9
  $region8: #{node_embedding_forward.14} parent=0 // pred_region
    _
  $region9: #{node_embedding_forward.14} parent=0 // pred_fallthru
    _
  // Predicated region
  $region10: #{node_embedding_forward.14} parent=0 // pred_check
    _
  $region11: #{node_embedding_forward.14} parent=0 // pred_check_branch
    %13 = sbr.rel (0) target = $region13
  $region12: #{node_embedding_forward.14} parent=0 // pred_region
    _
  $region13: #{node_embedding_forward.14} parent=0 // pred_fallthru
    _
  %v14 = vld [vmem:[%s0] sm:$0xff]
  %v15 = vld [vmem:[%s0 + $0x8] sm:$0xff]
  %v16 = vld [vmem:[%s1] sm:$0xff]
  %v17 = vld [vmem:[%s1 + $0x8] sm:$0xff]
  %v18 = vld [vmem:[%s1 + $0x10] sm:$0xff]
  %v19 = vld [vmem:[%s1 + $0x18] sm:$0xff]
  %v20 = vld [vmem:[%s1 + $0x20] sm:$0xff]
  %v21 = vld [vmem:[%s1 + $0x28] sm:$0xff]
  %v22 = vld [vmem:[%s1 + $0x30] sm:$0xff]
  %v23 = vld [vmem:[%s1 + $0x38] sm:$0xff]
  %v24 = vld [vmem:[%s1 + $0x40] sm:$0xff]
  %v25 = vld [vmem:[%s1 + $0x48] sm:$0xff]
  %v26 = vld [vmem:[%s1 + $0x50] sm:$0xff]
  %v27 = vld [vmem:[%s1 + $0x58] sm:$0xff]
  %v28 = vld [vmem:[%s1 + $0x60] sm:$0xff]
  %v29 = vld [vmem:[%s1 + $0x68] sm:$0xff]
  %v30 = vld [vmem:[%s1 + $0x70] sm:$0xff]
  %v31 = vld [vmem:[%s1 + $0x78] sm:$0xff]
  %v32 = vld [vmem:[%s2] sm:$0x1]
  %v34 = vlaneseq
  %v35 = vshrl.u32 %v34, 7
  %v36 = vsub.s32 0, %v35
  %v37 = vrot.slane %v32, %v36
  %39 = vmatprep.subr.mxu0 0.0
  %40 = vmatpush1.msra.mxu0 %v31
  %41 = vmatprep.subr.mxu0 0.0
  %42 = vmatpush1.msra.mxu0 %v30
  %43 = vmatprep.subr.mxu0 0.0
  %44 = vmatpush1.msra.mxu0 %v29
  %45 = vmatprep.subr.mxu0 0.0
  %46 = vmatpush1.msra.mxu0 %v28
  %47 = vmatprep.subr.mxu0 0.0
  %48 = vmatpush1.msra.mxu0 %v27
  %49 = vmatprep.subr.mxu0 0.0
  %50 = vmatpush1.msra.mxu0 %v26
  %51 = vmatprep.subr.mxu0 0.0
  %52 = vmatpush1.msra.mxu0 %v25
  %53 = vmatprep.subr.mxu0 0.0
  %54 = vmatpush1.msra.mxu0 %v24
  %55 = vmatprep.subr.mxu0 0.0
  %56 = vmatpush1.msra.mxu0 %v23
  %57 = vmatprep.subr.mxu0 0.0
  %58 = vmatpush1.msra.mxu0 %v22
  %59 = vmatprep.subr.mxu0 0.0
  %60 = vmatpush1.msra.mxu0 %v21
  %61 = vmatprep.subr.mxu0 0.0
  %62 = vmatpush1.msra.mxu0 %v20
  %63 = vmatprep.subr.mxu0 0.0
  %64 = vmatpush1.msra.mxu0 %v19
  %65 = vmatprep.subr.mxu0 0.0
  %66 = vmatpush1.msra.mxu0 %v18
  %67 = vmatprep.subr.mxu0 0.0
  %68 = vmatpush1.msra.mxu0 %v17
  %69 = vmatprep.subr.mxu0 0.0
  %70 = vmatpush1.msra.mxu0 %v16
  %71 = vmatprep.subr.mxu0 0.0
  %72 = vmatpush2.msra.mxu0 0.0
  %73 = vmatprep.subr.mxu0 0.0
  %74 = vmatpush2.msra.mxu0 0.0
  %75 = vmatprep.subr.mxu0 0.0
  %76 = vmatpush2.msra.mxu0 0.0
  %77 = vmatprep.subr.mxu0 0.0
  %78 = vmatpush2.msra.mxu0 0.0
  %79 = vmatprep.subr.mxu0 0.0
  %80 = vmatpush2.msra.mxu0 0.0
  %81 = vmatprep.subr.mxu0 0.0
  %82 = vmatpush2.msra.mxu0 0.0
  %83 = vmatprep.subr.mxu0 0.0
  %84 = vmatpush2.msra.mxu0 0.0
  %85 = vmatprep.subr.mxu0 0.0
  %86 = vmatpush2.msra.mxu0 0.0
  %87 = vmatprep.subr.mxu0 0.0
  %88 = vmatpush2.msra.mxu0 0.0
  %89 = vmatprep.subr.mxu0 0.0
  %90 = vmatpush2.msra.mxu0 0.0
  %91 = vmatprep.subr.mxu0 0.0
  %92 = vmatpush2.msra.mxu0 0.0
  %93 = vmatprep.subr.mxu0 0.0
  %94 = vmatpush2.msra.mxu0 0.0
  %95 = vmatprep.subr.mxu0 0.0
  %96 = vmatpush2.msra.mxu0 0.0
  %97 = vmatprep.subr.mxu0 0.0
  %98 = vmatpush2.msra.mxu0 0.0
  %99 = vmatprep.subr.mxu0 0.0
  %100 = vmatpush2.msra.mxu0 0.0
  %101 = vmatprep.subr.mxu0 0.0
  %102 = vmatpush2.msra.mxu0 0.0
  %103 = vmatprep.mubr.f32.mxu0 0.0
  %104 = vmatmul.mubr.f32.gmra.mxu0 %v14
  %v105 = vpop.f32.mrf.mxu0
  %v106 = vadd.f32 %v37, %v105
  %v107 = vpop.f32.mrf.mxu0
  %108 = vmatprep.mubr.f32.mxu0 0.0
  %109 = vmatmul.mubr.f32.gmra.mxu0 %v15
  %v110 = vpop.f32.mrf.mxu0
  %v111 = vadd.f32 %v37, %v110
  %v112 = vpop.f32.mrf.mxu0
  %113 = vdwg.mxu0
  %114 = vst [vmem:[%s3] sm:$0xff] %v106
  %115 = vst [vmem:[%s3 + $0x8] sm:$0xff] %v111
  // Predicated region
  $region14: #{node_embedding_forward.14} parent=0 // pred_check
    _
  $region15: #{node_embedding_forward.14} parent=0 // pred_check_branch
    %117 = sbr.rel (0) target = $region17
  $region16: #{node_embedding_forward.14} parent=0 // pred_region
    _
  $region17: #{node_embedding_forward.14} parent=0 // pred_fallthru
    _
  // Predicated region
  $region18: #{node_embedding_forward.14} parent=0 // pred_check
    _
  $region19: #{node_embedding_forward.14} parent=0 // pred_check_branch
    %119 = sbr.rel (0) target = $region21
  $region20: #{node_embedding_forward.14} parent=0 // pred_region
    _
  $region21: #{node_embedding_forward.14} parent=0 // pred_fallthru
    _

// kernel: node_embedding_forward.17
$region0: #{node_embedding_forward.17}
  #allocation0 [shape = 'u32[]', space=smem, size = 0x4, offset = 0x4, fixed_abs, tag = 'smem constant byte address 0x4 - core index']
  #allocation1 [shape = 'u32[144,128]{1,0:T(1,128)}', space=vmem, size = 0x12000, scoped, tag = 'internal scratch']
  %s0 = inlined_call_operand.vmem [shape: f32[8,128], index: 0, kind: input, shape index: {}]
  %s1 = inlined_call_operand.vmem [shape: f32[128,128], index: 1, kind: input, shape index: {}]
  %s2 = inlined_call_operand.vmem [shape: f32[1,128], index: 2, kind: input, shape index: {}]
  %s3 = inlined_call_operand.vmem [shape: f32[8,128], index: 3, kind: output, shape index: {}]
  %s4 = sld [smem:[#allocation0]]
  $region22: #{node_embedding_forward.17} parent=0
    _
  %s6 = ssub.s32 1, %s4
  %s7 = scalar_select 0, %s6, %s4
  // Predicated region
  $region2: #{node_embedding_forward.17} parent=0 // pred_check
    _
  $region3: #{node_embedding_forward.17} parent=0 // pred_check_branch
    %9 = sbr.rel (0) target = $region5
  $region4: #{node_embedding_forward.17} parent=0 // pred_region
    _
  $region5: #{node_embedding_forward.17} parent=0 // pred_fallthru
    _
  // Predicated region
  $region6: #{node_embedding_forward.17} parent=0 // pred_check
    _
  $region7: #{node_embedding_forward.17} parent=0 // pred_check_branch
    %11 = sbr.rel (0) target = $region9
  $region8: #{node_embedding_forward.17} parent=0 // pred_region
    _
  $region9: #{node_embedding_forward.17} parent=0 // pred_fallthru
    _
  // Predicated region
  $region10: #{node_embedding_forward.17} parent=0 // pred_check
    _
  $region11: #{node_embedding_forward.17} parent=0 // pred_check_branch
    %13 = sbr.rel (0) target = $region13
  $region12: #{node_embedding_forward.17} parent=0 // pred_region
    _
  $region13: #{node_embedding_forward.17} parent=0 // pred_fallthru
    _
  %v14 = vld [vmem:[%s0] sm:$0xff]
  %v15 = vld [vmem:[%s1] sm:$0xff]
  %v16 = vld [vmem:[%s1 + $0x8] sm:$0xff]
  %v17 = vld [vmem:[%s1 + $0x10] sm:$0xff]
  %v18 = vld [vmem:[%s1 + $0x18] sm:$0xff]
  %v19 = vld [vmem:[%s1 + $0x20] sm:$0xff]
  %v20 = vld [vmem:[%s1 + $0x28] sm:$0xff]
  %v21 = vld [vmem:[%s1 + $0x30] sm:$0xff]
  %v22 = vld [vmem:[%s1 + $0x38] sm:$0xff]
  %v23 = vld [vmem:[%s1 + $0x40] sm:$0xff]
  %v24 = vld [vmem:[%s1 + $0x48] sm:$0xff]
  %v25 = vld [vmem:[%s1 + $0x50] sm:$0xff]
  %v26 = vld [vmem:[%s1 + $0x58] sm:$0xff]
  %v27 = vld [vmem:[%s1 + $0x60] sm:$0xff]
  %v28 = vld [vmem:[%s1 + $0x68] sm:$0xff]
  %v29 = vld [vmem:[%s1 + $0x70] sm:$0xff]
  %v30 = vld [vmem:[%s1 + $0x78] sm:$0xff]
  %v31 = vld [vmem:[%s2] sm:$0x1]
  %v33 = vlaneseq
  %v34 = vshrl.u32 %v33, 7
  %v35 = vsub.s32 0, %v34
  %v36 = vrot.slane %v31, %v35
  %38 = vmatprep.subr.mxu0 0.0
  %39 = vmatpush1.msra.mxu0 %v30
  %40 = vmatprep.subr.mxu0 0.0
  %41 = vmatpush1.msra.mxu0 %v29
  %42 = vmatprep.subr.mxu0 0.0
  %43 = vmatpush1.msra.mxu0 %v28
  %44 = vmatprep.subr.mxu0 0.0
  %45 = vmatpush1.msra.mxu0 %v27
  %46 = vmatprep.subr.mxu0 0.0
  %47 = vmatpush1.msra.mxu0 %v26
  %48 = vmatprep.subr.mxu0 0.0
  %49 = vmatpush1.msra.mxu0 %v25
  %50 = vmatprep.subr.mxu0 0.0
  %51 = vmatpush1.msra.mxu0 %v24
  %52 = vmatprep.subr.mxu0 0.0
  %53 = vmatpush1.msra.mxu0 %v23
  %54 = vmatprep.subr.mxu0 0.0
  %55 = vmatpush1.msra.mxu0 %v22
  %56 = vmatprep.subr.mxu0 0.0
  %57 = vmatpush1.msra.mxu0 %v21
  %58 = vmatprep.subr.mxu0 0.0
  %59 = vmatpush1.msra.mxu0 %v20
  %60 = vmatprep.subr.mxu0 0.0
  %61 = vmatpush1.msra.mxu0 %v19
  %62 = vmatprep.subr.mxu0 0.0
  %63 = vmatpush1.msra.mxu0 %v18
  %64 = vmatprep.subr.mxu0 0.0
  %65 = vmatpush1.msra.mxu0 %v17
  %66 = vmatprep.subr.mxu0 0.0
  %67 = vmatpush1.msra.mxu0 %v16
  %68 = vmatprep.subr.mxu0 0.0
  %69 = vmatpush1.msra.mxu0 %v15
  %70 = vmatprep.subr.mxu0 0.0
  %71 = vmatpush2.msra.mxu0 0.0
  %72 = vmatprep.subr.mxu0 0.0
  %73 = vmatpush2.msra.mxu0 0.0
  %74 = vmatprep.subr.mxu0 0.0
  %75 = vmatpush2.msra.mxu0 0.0
  %76 = vmatprep.subr.mxu0 0.0
  %77 = vmatpush2.msra.mxu0 0.0
  %78 = vmatprep.subr.mxu0 0.0
  %79 = vmatpush2.msra.mxu0 0.0
  %80 = vmatprep.subr.mxu0 0.0
  %81 = vmatpush2.msra.mxu0 0.0
  %82 = vmatprep.subr.mxu0 0.0
  %83 = vmatpush2.msra.mxu0 0.0
  %84 = vmatprep.subr.mxu0 0.0
  %85 = vmatpush2.msra.mxu0 0.0
  %86 = vmatprep.subr.mxu0 0.0
  %87 = vmatpush2.msra.mxu0 0.0
  %88 = vmatprep.subr.mxu0 0.0
  %89 = vmatpush2.msra.mxu0 0.0
  %90 = vmatprep.subr.mxu0 0.0
  %91 = vmatpush2.msra.mxu0 0.0
  %92 = vmatprep.subr.mxu0 0.0
  %93 = vmatpush2.msra.mxu0 0.0
  %94 = vmatprep.subr.mxu0 0.0
  %95 = vmatpush2.msra.mxu0 0.0
  %96 = vmatprep.subr.mxu0 0.0
  %97 = vmatpush2.msra.mxu0 0.0
  %98 = vmatprep.subr.mxu0 0.0
  %99 = vmatpush2.msra.mxu0 0.0
  %100 = vmatprep.subr.mxu0 0.0
  %101 = vmatpush2.msra.mxu0 0.0
  %102 = vmatprep.mubr.f32.mxu0 0.0
  %103 = vmatmul.mubr.f32.gmra.mxu0 %v14
  %v104 = vpop.f32.mrf.mxu0
  %v105 = vadd.f32 %v36, %v104
  %v106 = vpop.f32.mrf.mxu0
  %107 = vdwg.mxu0
  %108 = vst [vmem:[%s3] sm:$0xff] %v105
  // Predicated region
  $region14: #{node_embedding_forward.17} parent=0 // pred_check
    _
  $region15: #{node_embedding_forward.17} parent=0 // pred_check_branch
    %110 = sbr.rel (0) target = $region17
  $region16: #{node_embedding_forward.17} parent=0 // pred_region
    _
  $region17: #{node_embedding_forward.17} parent=0 // pred_fallthru
    _
  // Predicated region
  $region18: #{node_embedding_forward.17} parent=0 // pred_check
    _
  $region19: #{node_embedding_forward.17} parent=0 // pred_check_branch
    %112 = sbr.rel (0) target = $region21
  $region20: #{node_embedding_forward.17} parent=0 // pred_region
    _
  $region21: #{node_embedding_forward.17} parent=0 // pred_fallthru
    _

</llo_original>
